<compile_context>
chip_gen: v7x
topology: tpu7x:2x2x1
jax: 0.10.0
libtpu: 0.0.40
codegen_flags: <defaults>
</compile_context>

<pallas_src>
import jax
import jax.numpy as jnp
from jax.experimental import pallas as pl
from jax.experimental.pallas import tpu as pltpu


_LEAKY_SLOPE = 0.2


def _leaky_relu(x, slope=_LEAKY_SLOPE):
    return jnp.where(x >= 0, x, slope * x)


def _round_up(x, m):
    return (x + m - 1) // m * m


def _num_tensorcores():
    """Best-effort TensorCore-per-device count (1 on v5e/v6e, 2 on v7x)."""
    try:
        info = pltpu.get_tpu_info()
    except Exception:
        return 1
    for attr in ("num_cores", "core_count", "tensorcore_count", "num_tensorcores"):
        n = getattr(info, attr, None)
        if isinstance(n, int) and n > 0:
            return n
    return 1


# ----------------------------------------------------------------------------
# Kernel
# ----------------------------------------------------------------------------
def generator_kernel(
    z_ref,
    w1_ref, b1_ref,
    w2_ref, b2_ref,
    w3_ref, b3_ref,
    w4_ref, b4_ref,
    o_ref,
):
    """Fused Generator MLP on one batch tile.

    BatchNorm (eval mode) is pre-folded into the weights/biases on the host, so
    each hidden layer is Linear -> LeakyReLU and the last is Linear -> Tanh.
    Dropout(0.1) is identity in eval mode.  Matmuls run in the weight dtype
    (f32 or bf16) with f32 accumulation; all elementwise math stays in f32
    (v5e has no bf16 VPU/EUP path).
    """

    def layer(x, w_ref, b_ref):
        # astype is a no-op when dtypes already match (e.g. bf16 z for layer 1).
        return jnp.dot(
            x.astype(w_ref.dtype), w_ref[...],
            preferred_element_type=jnp.float32,
        ) + b_ref[...]

    h = _leaky_relu(layer(z_ref[...], w1_ref, b1_ref))
    h = _leaky_relu(layer(h, w2_ref, b2_ref))   # Dropout(0.1) == identity (eval)
    h = _leaky_relu(layer(h, w3_ref, b3_ref))
    h = layer(h, w4_ref, b4_ref)
    o_ref[...] = jnp.tanh(h).astype(o_ref.dtype)


# ----------------------------------------------------------------------------
# Host-side parameter preparation (hoisted: call ONCE, reuse across forwards)
# ----------------------------------------------------------------------------
def prepare_generator_params(params, *, use_bf16=True):
    """Fold BatchNorm into the linears, zero-pad feature dims to multiples of
    128, and (optionally) cast weights to bf16.  Returns a dict consumed by
    generator_forward; do this once next to init, not per forward call."""
    input_dim = params["w1"].shape[0]
    output_dim = params["w4"].shape[1]

    # BN folding: w_eff = w * s (per out-feature), b_eff = b * s + t.
    folded = {}
    for idx in (1, 2, 3):
        s = params[f"s{idx}"].reshape(1, -1)
        t = params[f"t{idx}"].reshape(1, -1)
        folded[f"w{idx}"] = params[f"w{idx}"] * s
        folded[f"b{idx}"] = params[f"b{idx}"].reshape(1, -1) * s + t
    folded["w4"] = params["w4"]
    folded["b4"] = params["b4"].reshape(1, -1)

    # Pad every feature dim to a multiple of 128 (lane-dense tiles / MXU fill).
    # (On v6e/v7x a 256 multiple would fill the 256-wide MXU better for dims
    # like 384; default hidden dims 256/512 are already fine, so keep 128.)
    dims = [input_dim] + [folded[f"w{i}"].shape[1] for i in (1, 2, 3, 4)]
    pdims = [_round_up(d, 128) for d in dims]

    def pad2d(a, rows, cols):
        return jnp.pad(a, ((0, rows - a.shape[0]), (0, cols - a.shape[1])))

    ws, bs = [], []
    for i in range(1, 5):
        w = pad2d(folded[f"w{i}"], pdims[i - 1], pdims[i])
        if use_bf16:
            w = w.astype(jnp.bfloat16)
        b = pad2d(folded[f"b{i}"], 1, pdims[i])  # biases stay f32 (added post-acc)
        ws.append(w)
        bs.append(b)

    return {
        "ws": ws,
        "bs": bs,
        "pdims": pdims,
        "input_dim": input_dim,
        "output_dim": output_dim,
        "use_bf16": use_bf16,
    }


# ----------------------------------------------------------------------------
# Forward wrapper
# ----------------------------------------------------------------------------
def generator_forward(z, params, *, tile_m=512, single_buffer_weights=True):
    """Run the Generator forward pass with a fused Pallas kernel.

    z: [B, input_dim] float32.
    params: output of prepare_generator_params() (preferred), or the raw dict
            from init_generator_params (prepared on the fly, slower per call).
    """
    prep = params if "ws" in params else prepare_generator_params(params)
    ws, bs, pdims = prep["ws"], prep["bs"], prep["pdims"]
    output_dim, use_bf16 = prep["output_dim"], prep["use_bf16"]

    B, input_dim = z.shape
    assert input_dim == prep["input_dim"]

    # ---- batch tiling: big tile for MXU fill, shrunk only for small batches.
    row_align = 16 if use_bf16 else 8
    tile_m = _round_up(max(tile_m, row_align), row_align)
    tile_m = min(tile_m, _round_up(B, row_align))
    B_pad = _round_up(B, tile_m)
    # Only split the tile to create extra grid steps if the chip actually has
    # multiple TensorCores (v7x); on single-TC v5e/v6e the grid is a serial
    # loop and splitting only adds per-step overhead.
    n_cores = _num_tensorcores()
    if (n_cores > 1 and B_pad // tile_m < n_cores
            and tile_m >= 2 * row_align and (tile_m // 2) % row_align == 0):
        tile_m //= 2
        B_pad = _round_up(B, tile_m)

    act_dtype = jnp.bfloat16 if use_bf16 else jnp.float32
    z_pad = jnp.pad(z, ((0, B_pad - B), (0, pdims[0] - input_dim))).astype(act_dtype)
    grid = (B_pad // tile_m,)

    args = [z_pad]
    for w, b in zip(ws, bs):
        args += [w, b]

    # ---- VMEM budget: double-buffered batch tiles + resident weights/biases
    # (+ generous f32 activation scratch), with headroom.
    w_bytes = sum(int(w.size) * w.dtype.itemsize for w in ws)
    b_bytes = sum(int(b.size) * b.dtype.itemsize for b in bs)
    wbuf = 1 if single_buffer_weights else 2
    in_tile = tile_m * pdims[0] * z_pad.dtype.itemsize
    out_tile = tile_m * pdims[-1] * 4
    act_scratch = 4 * tile_m * max(pdims) * 4
    need = 2 * (in_tile + out_tile) + wbuf * (w_bytes + b_bytes) + act_scratch
    vmem_limit = int(min(64 << 20, max(2 * need, 16 << 20)))

    # ---- advisory cost estimate for XLA's scheduler.
    flops = 2 * B_pad * sum(pdims[i] * pdims[i + 1] for i in range(4))
    bytes_accessed = int(
        z_pad.size * z_pad.dtype.itemsize + w_bytes + b_bytes + B_pad * pdims[-1] * 4
    )
    cost = pl.CostEstimate(
        flops=flops,
        transcendentals=B_pad * pdims[-1],  # tanh
        bytes_accessed=bytes_accessed,
    )

    def batch_spec(feat):
        return pl.BlockSpec((tile_m, feat), lambda i: (i, 0))

    def run(weight_pipeline_mode):
        def const_spec(shape):
            # Whole (small) parameter resident in VMEM; constant index across
            # the grid, so single-buffering saves VMEM with zero DMA cost.
            kwargs = {}
            if weight_pipeline_mode is not None:
                kwargs["pipeline_mode"] = weight_pipeline_mode
            return pl.BlockSpec(shape, lambda i: (0,) * len(shape), **kwargs)

        in_specs = [batch_spec(pdims[0])]
        for w, b in zip(ws, bs):
            in_specs += [const_spec(w.shape), const_spec(b.shape)]

        return pl.pallas_call(
            generator_kernel,
            out_shape=jax.ShapeDtypeStruct((B_pad, pdims[-1]), jnp.float32),
            grid_spec=pltpu.PrefetchScalarGridSpec(
                num_scalar_prefetch=0,
                grid=grid,
                in_specs=in_specs,
                out_specs=batch_spec(pdims[-1]),
            ),
            compiler_params=pltpu.CompilerParams(
                dimension_semantics=("parallel",),
                vmem_limit_bytes=vmem_limit,
            ),
            cost_estimate=cost,
        )(*args)

    if single_buffer_weights:
        try:
            out = run(pl.Buffered(1))
        except Exception:
            # Older jax: pipeline_mode=Buffered(1) unsupported -> default buffering.
            out = run(None)
    else:
        out = run(None)

    return out[:B, :output_dim]


# ----------------------------------------------------------------------------
# Parameter init mirroring the PyTorch module's __init__ (eval-mode BN stats)
# ----------------------------------------------------------------------------
def init_generator_params(key, input_dim, output_dim, hidden_dim=256):
    h1 = hidden_dim
    h2 = hidden_dim * 2
    dims = [(input_dim, h1), (h1, h2), (h2, h2), (h2, output_dim)]
    params = {}
    keys = jax.random.split(key, len(dims))
    for idx, ((fan_in, fan_out), k) in enumerate(zip(dims, keys), start=1):
        # kaiming_normal_ (fan_in, gain=sqrt(2)); stored [in, out]: y = x @ W + b.
        std = (2.0 / fan_in) ** 0.5
        w = std * jax.random.normal(k, (fan_in, fan_out), dtype=jnp.float32)
        params[f"w{idx}"] = w
        params[f"b{idx}"] = jnp.zeros((1, fan_out), dtype=jnp.float32)

    # BatchNorm1d (eval mode, fresh running stats): gamma=1, beta=0,
    # running_mean=0, running_var=1, eps=1e-5.
    eps = 1e-5
    for idx, feat in zip([1, 2, 3], [h1, h2, h2]):
        gamma = jnp.ones((1, feat), dtype=jnp.float32)
        beta = jnp.zeros((1, feat), dtype=jnp.float32)
        running_mean = jnp.zeros((1, feat), dtype=jnp.float32)
        running_var = jnp.ones((1, feat), dtype=jnp.float32)
        scale = gamma / jnp.sqrt(running_var + eps)
        shift = beta - running_mean * scale
        params[f"s{idx}"] = scale
        params[f"t{idx}"] = shift
    return params


def generator_forward_ref(z, params):
    """Pure-JAX reference following the PyTorch module (eval mode), unfolded."""
    h = z @ params["w1"] + params["b1"]
    h = _leaky_relu(h * params["s1"] + params["t1"])
    h = h @ params["w2"] + params["b2"]
    h = _leaky_relu(h * params["s2"] + params["t2"])
    h = h @ params["w3"] + params["b3"]
    h = _leaky_relu(h * params["s3"] + params["t3"])
    h = h @ params["w4"] + params["b4"]
    return jnp.tanh(h)


if __name__ == "__main__":
    # Small shapes consistent with the module: batch=8, input_dim=16,
    # hidden_dim=32 (=> hidden*2 = 64), output_dim=16.
    batch, input_dim, hidden_dim, output_dim = 8, 16, 32, 16

    key = jax.random.PRNGKey(0)
    k_params, k_z = jax.random.split(key)
    params = init_generator_params(k_params, input_dim, output_dim, hidden_dim)
    z = jax.random.normal(k_z, (batch, input_dim), dtype=jnp.float32)

    ref = generator_forward_ref(z, params)

    # f32 MXU path: bit-for-bit-ish check against the unfolded reference.
    prep_f32 = prepare_generator_params(params, use_bf16=False)
    out_f32 = jax.block_until_ready(generator_forward(z, prep_f32))
    assert out_f32.shape == (batch, output_dim)
    assert jnp.allclose(out_f32, ref, atol=1e-4, rtol=1e-4), "f32 mismatch vs reference"

    # bf16 MXU path (default): bf16 operands / f32 accumulation -> loose tolerance.
    prep_bf16 = prepare_generator_params(params)  # use_bf16=True by default
    out_bf16 = jax.block_until_ready(generator_forward(z, prep_bf16))
    assert out_bf16.shape == (batch, output_dim)
    assert jnp.allclose(out_bf16, ref, atol=3e-2, rtol=3e-2), "bf16 mismatch vs reference"

    print("KERNEL_OK")
</pallas_src>

<mosaic_0001>
module attributes {stable_mosaic.version = 11 : i64} {
  func.func @generator_kernel(%arg0: i32, %arg1: memref<8x128xf32, #tpu.memory_space<vmem>>, %arg2: memref<128x128xf32, #tpu.memory_space<vmem>>, %arg3: memref<1x128xf32, #tpu.memory_space<vmem>>, %arg4: memref<128x128xf32, #tpu.memory_space<vmem>>, %arg5: memref<1x128xf32, #tpu.memory_space<vmem>>, %arg6: memref<128x128xf32, #tpu.memory_space<vmem>>, %arg7: memref<1x128xf32, #tpu.memory_space<vmem>>, %arg8: memref<128x128xf32, #tpu.memory_space<vmem>>, %arg9: memref<1x128xf32, #tpu.memory_space<vmem>>, %arg10: memref<8x128xf32, #tpu.memory_space<vmem>>) attributes {dimension_semantics = [#tpu.dimension_semantics<parallel>], iteration_bounds = array<i64: 1>, scalar_prefetch = 0 : i64, scratch_operands = 0 : i64, tpu.core_type = #tpu.core_type<tc>, window_params = [{transform_indices = @transform_0, window_bounds = array<i64: 8, 128>}, {pipeline_mode = #tpu.pipeline_mode<synchronous>, transform_indices = @transform_1, window_bounds = array<i64: 128, 128>}, {pipeline_mode = #tpu.pipeline_mode<synchronous>, transform_indices = @transform_2, window_bounds = array<i64: 1, 128>}, {pipeline_mode = #tpu.pipeline_mode<synchronous>, transform_indices = @transform_3, window_bounds = array<i64: 128, 128>}, {pipeline_mode = #tpu.pipeline_mode<synchronous>, transform_indices = @transform_4, window_bounds = array<i64: 1, 128>}, {pipeline_mode = #tpu.pipeline_mode<synchronous>, transform_indices = @transform_5, window_bounds = array<i64: 128, 128>}, {pipeline_mode = #tpu.pipeline_mode<synchronous>, transform_indices = @transform_6, window_bounds = array<i64: 1, 128>}, {pipeline_mode = #tpu.pipeline_mode<synchronous>, transform_indices = @transform_7, window_bounds = array<i64: 128, 128>}, {pipeline_mode = #tpu.pipeline_mode<synchronous>, transform_indices = @transform_8, window_bounds = array<i64: 1, 128>}, {transform_indices = @transform_9, window_bounds = array<i64: 8, 128>}]} {
    %c0 = arith.constant 0 : index
    %c0_0 = arith.constant 0 : index
    %0 = vector.load %arg1[%c0, %c0_0] : memref<8x128xf32, #tpu.memory_space<vmem>>, vector<8x128xf32>
    %c0_1 = arith.constant 0 : index
    %c0_2 = arith.constant 0 : index
    %1 = vector.load %arg2[%c0_1, %c0_2] : memref<128x128xf32, #tpu.memory_space<vmem>>, vector<128x128xf32>
    %cst = arith.constant dense<0.000000e+00> : vector<8x128xf32>
    %2 = tpu.matmul %0, %1, %cst {dimension_numbers = #tpu.dot_dimension_numbers<[1], [0], [0], [1], [0, 0, 1, 1], [], []>} : vector<8x128xf32>, vector<128x128xf32>, vector<8x128xf32> -> vector<8x128xf32>
    %c0_3 = arith.constant 0 : index
    %c0_4 = arith.constant 0 : index
    %3 = vector.load %arg3[%c0_3, %c0_4] : memref<1x128xf32, #tpu.memory_space<vmem>>, vector<1x128xf32>
    %4 = vector.broadcast %3 : vector<1x128xf32> to vector<8x128xf32>
    %5 = arith.addf %2, %4 : vector<8x128xf32>
    %cst_5 = arith.constant 0.000000e+00 : f32
    %6 = vector.broadcast %cst_5 : f32 to vector<8x128xf32>
    %7 = arith.cmpf oge, %5, %6 : vector<8x128xf32>
    %cst_6 = arith.constant 2.000000e-01 : f32
    %8 = vector.broadcast %cst_6 : f32 to vector<8x128xf32>
    %9 = arith.mulf %8, %5 : vector<8x128xf32>
    %10 = arith.select %7, %5, %9 : vector<8x128xi1>, vector<8x128xf32>
    %c0_7 = arith.constant 0 : index
    %c0_8 = arith.constant 0 : index
    %11 = vector.load %arg4[%c0_7, %c0_8] : memref<128x128xf32, #tpu.memory_space<vmem>>, vector<128x128xf32>
    %cst_9 = arith.constant dense<0.000000e+00> : vector<8x128xf32>
    %12 = tpu.matmul %10, %11, %cst_9 {dimension_numbers = #tpu.dot_dimension_numbers<[1], [0], [0], [1], [0, 0, 1, 1], [], []>} : vector<8x128xf32>, vector<128x128xf32>, vector<8x128xf32> -> vector<8x128xf32>
    %c0_10 = arith.constant 0 : index
    %c0_11 = arith.constant 0 : index
    %13 = vector.load %arg5[%c0_10, %c0_11] : memref<1x128xf32, #tpu.memory_space<vmem>>, vector<1x128xf32>
    %14 = vector.broadcast %13 : vector<1x128xf32> to vector<8x128xf32>
    %15 = arith.addf %12, %14 : vector<8x128xf32>
    %cst_12 = arith.constant 0.000000e+00 : f32
    %16 = vector.broadcast %cst_12 : f32 to vector<8x128xf32>
    %17 = arith.cmpf oge, %15, %16 : vector<8x128xf32>
    %cst_13 = arith.constant 2.000000e-01 : f32
    %18 = vector.broadcast %cst_13 : f32 to vector<8x128xf32>
    %19 = arith.mulf %18, %15 : vector<8x128xf32>
    %20 = arith.select %17, %15, %19 : vector<8x128xi1>, vector<8x128xf32>
    %c0_14 = arith.constant 0 : index
    %c0_15 = arith.constant 0 : index
    %21 = vector.load %arg6[%c0_14, %c0_15] : memref<128x128xf32, #tpu.memory_space<vmem>>, vector<128x128xf32>
    %cst_16 = arith.constant dense<0.000000e+00> : vector<8x128xf32>
    %22 = tpu.matmul %20, %21, %cst_16 {dimension_numbers = #tpu.dot_dimension_numbers<[1], [0], [0], [1], [0, 0, 1, 1], [], []>} : vector<8x128xf32>, vector<128x128xf32>, vector<8x128xf32> -> vector<8x128xf32>
    %c0_17 = arith.constant 0 : index
    %c0_18 = arith.constant 0 : index
    %23 = vector.load %arg7[%c0_17, %c0_18] : memref<1x128xf32, #tpu.memory_space<vmem>>, vector<1x128xf32>
    %24 = vector.broadcast %23 : vector<1x128xf32> to vector<8x128xf32>
    %25 = arith.addf %22, %24 : vector<8x128xf32>
    %cst_19 = arith.constant 0.000000e+00 : f32
    %26 = vector.broadcast %cst_19 : f32 to vector<8x128xf32>
    %27 = arith.cmpf oge, %25, %26 : vector<8x128xf32>
    %cst_20 = arith.constant 2.000000e-01 : f32
    %28 = vector.broadcast %cst_20 : f32 to vector<8x128xf32>
    %29 = arith.mulf %28, %25 : vector<8x128xf32>
    %30 = arith.select %27, %25, %29 : vector<8x128xi1>, vector<8x128xf32>
    %c0_21 = arith.constant 0 : index
    %c0_22 = arith.constant 0 : index
    %31 = vector.load %arg8[%c0_21, %c0_22] : memref<128x128xf32, #tpu.memory_space<vmem>>, vector<128x128xf32>
    %cst_23 = arith.constant dense<0.000000e+00> : vector<8x128xf32>
    %32 = tpu.matmul %30, %31, %cst_23 {dimension_numbers = #tpu.dot_dimension_numbers<[1], [0], [0], [1], [0, 0, 1, 1], [], []>} : vector<8x128xf32>, vector<128x128xf32>, vector<8x128xf32> -> vector<8x128xf32>
    %c0_24 = arith.constant 0 : index
    %c0_25 = arith.constant 0 : index
    %33 = vector.load %arg9[%c0_24, %c0_25] : memref<1x128xf32, #tpu.memory_space<vmem>>, vector<1x128xf32>
    %34 = vector.broadcast %33 : vector<1x128xf32> to vector<8x128xf32>
    %35 = arith.addf %32, %34 : vector<8x128xf32>
    %36 = math.tanh %35 : vector<8x128xf32>
    %c0_26 = arith.constant 0 : index
    %c0_27 = arith.constant 0 : index
    %37 = vector.load %arg10[%c0_26, %c0_27] : memref<8x128xf32, #tpu.memory_space<vmem>>, vector<8x128xf32>
    tpu.vector_store %arg10[%c0_26, %c0_27], %36 {strides = array<i32>} : memref<8x128xf32, #tpu.memory_space<vmem>>, vector<8x128xf32>,
    return
  }
  func.func @transform_0(%arg0: i32) -> (i32, i32) {
    %c0_i32 = arith.constant 0 : i32
    %c0_i32_0 = arith.constant 0 : i32
    return %arg0, %c0_i32 : i32, i32
  }
  func.func @transform_1(%arg0: i32) -> (i32, i32) {
    %c0_i32 = arith.constant 0 : i32
    %c0_i32_0 = arith.constant 0 : i32
    %c0_i32_1 = arith.constant 0 : i32
    return %c0_i32, %c0_i32_0 : i32, i32
  }
  func.func @transform_2(%arg0: i32) -> (i32, i32) {
    %c0_i32 = arith.constant 0 : i32
    %c0_i32_0 = arith.constant 0 : i32
    %c0_i32_1 = arith.constant 0 : i32
    return %c0_i32, %c0_i32_0 : i32, i32
  }
  func.func @transform_3(%arg0: i32) -> (i32, i32) {
    %c0_i32 = arith.constant 0 : i32
    %c0_i32_0 = arith.constant 0 : i32
    %c0_i32_1 = arith.constant 0 : i32
    return %c0_i32, %c0_i32_0 : i32, i32
  }
  func.func @transform_4(%arg0: i32) -> (i32, i32) {
    %c0_i32 = arith.constant 0 : i32
    %c0_i32_0 = arith.constant 0 : i32
    %c0_i32_1 = arith.constant 0 : i32
    return %c0_i32, %c0_i32_0 : i32, i32
  }
  func.func @transform_5(%arg0: i32) -> (i32, i32) {
    %c0_i32 = arith.constant 0 : i32
    %c0_i32_0 = arith.constant 0 : i32
    %c0_i32_1 = arith.constant 0 : i32
    return %c0_i32, %c0_i32_0 : i32, i32
  }
  func.func @transform_6(%arg0: i32) -> (i32, i32) {
    %c0_i32 = arith.constant 0 : i32
    %c0_i32_0 = arith.constant 0 : i32
    %c0_i32_1 = arith.constant 0 : i32
    return %c0_i32, %c0_i32_0 : i32, i32
  }
  func.func @transform_7(%arg0: i32) -> (i32, i32) {
    %c0_i32 = arith.constant 0 : i32
    %c0_i32_0 = arith.constant 0 : i32
    %c0_i32_1 = arith.constant 0 : i32
    return %c0_i32, %c0_i32_0 : i32, i32
  }
  func.func @transform_8(%arg0: i32) -> (i32, i32) {
    %c0_i32 = arith.constant 0 : i32
    %c0_i32_0 = arith.constant 0 : i32
    %c0_i32_1 = arith.constant 0 : i32
    return %c0_i32, %c0_i32_0 : i32, i32
  }
  func.func @transform_9(%arg0: i32) -> (i32, i32) {
    %c0_i32 = arith.constant 0 : i32
    %c0_i32_0 = arith.constant 0 : i32
    return %arg0, %c0_i32 : i32, i32
  }
}

module attributes {stable_mosaic.version = 11 : i64} {
  func.func @generator_kernel(%arg0: i32, %arg1: memref<8x128xf32, #tpu.memory_space<vmem>>, %arg2: memref<128x128xf32, #tpu.memory_space<vmem>>, %arg3: memref<1x128xf32, #tpu.memory_space<vmem>>, %arg4: memref<128x128xf32, #tpu.memory_space<vmem>>, %arg5: memref<1x128xf32, #tpu.memory_space<vmem>>, %arg6: memref<128x128xf32, #tpu.memory_space<vmem>>, %arg7: memref<1x128xf32, #tpu.memory_space<vmem>>, %arg8: memref<128x128xf32, #tpu.memory_space<vmem>>, %arg9: memref<1x128xf32, #tpu.memory_space<vmem>>, %arg10: memref<8x128xf32, #tpu.memory_space<vmem>>) attributes {dimension_semantics = [#tpu.dimension_semantics<parallel>], iteration_bounds = array<i64: 1>, scalar_prefetch = 0 : i64, scratch_operands = 0 : i64, tpu.core_type = #tpu.core_type<tc>, window_params = [{transform_indices = @transform_0, window_bounds = array<i64: 8, 128>}, {pipeline_mode = #tpu.pipeline_mode<synchronous>, transform_indices = @transform_1, window_bounds = array<i64: 128, 128>}, {pipeline_mode = #tpu.pipeline_mode<synchronous>, transform_indices = @transform_2, window_bounds = array<i64: 1, 128>}, {pipeline_mode = #tpu.pipeline_mode<synchronous>, transform_indices = @transform_3, window_bounds = array<i64: 128, 128>}, {pipeline_mode = #tpu.pipeline_mode<synchronous>, transform_indices = @transform_4, window_bounds = array<i64: 1, 128>}, {pipeline_mode = #tpu.pipeline_mode<synchronous>, transform_indices = @transform_5, window_bounds = array<i64: 128, 128>}, {pipeline_mode = #tpu.pipeline_mode<synchronous>, transform_indices = @transform_6, window_bounds = array<i64: 1, 128>}, {pipeline_mode = #tpu.pipeline_mode<synchronous>, transform_indices = @transform_7, window_bounds = array<i64: 128, 128>}, {pipeline_mode = #tpu.pipeline_mode<synchronous>, transform_indices = @transform_8, window_bounds = array<i64: 1, 128>}, {transform_indices = @transform_9, window_bounds = array<i64: 8, 128>}]} {
    %c0 = arith.constant 0 : index
    %c0_0 = arith.constant 0 : index
    %0 = vector.load %arg1[%c0, %c0_0] : memref<8x128xf32, #tpu.memory_space<vmem>>, vector<8x128xf32>
    %c0_1 = arith.constant 0 : index
    %c0_2 = arith.constant 0 : index
    %1 = vector.load %arg2[%c0_1, %c0_2] : memref<128x128xf32, #tpu.memory_space<vmem>>, vector<128x128xf32>
    %cst = arith.constant dense<0.000000e+00> : vector<8x128xf32>
    %2 = tpu.matmul %0, %1, %cst {dimension_numbers = #tpu.dot_dimension_numbers<[1], [0], [0], [1], [0, 0, 1, 1], [], []>} : vector<8x128xf32>, vector<128x128xf32>, vector<8x128xf32> -> vector<8x128xf32>
    %c0_3 = arith.constant 0 : index
    %c0_4 = arith.constant 0 : index
    %3 = vector.load %arg3[%c0_3, %c0_4] : memref<1x128xf32, #tpu.memory_space<vmem>>, vector<1x128xf32>
    %4 = vector.broadcast %3 : vector<1x128xf32> to vector<8x128xf32>
    %5 = arith.addf %2, %4 : vector<8x128xf32>
    %cst_5 = arith.constant 0.000000e+00 : f32
    %6 = vector.broadcast %cst_5 : f32 to vector<8x128xf32>
    %7 = arith.cmpf oge, %5, %6 : vector<8x128xf32>
    %cst_6 = arith.constant 2.000000e-01 : f32
    %8 = vector.broadcast %cst_6 : f32 to vector<8x128xf32>
    %9 = arith.mulf %8, %5 : vector<8x128xf32>
    %10 = arith.select %7, %5, %9 : vector<8x128xi1>, vector<8x128xf32>
    %c0_7 = arith.constant 0 : index
    %c0_8 = arith.constant 0 : index
    %11 = vector.load %arg4[%c0_7, %c0_8] : memref<128x128xf32, #tpu.memory_space<vmem>>, vector<128x128xf32>
    %cst_9 = arith.constant dense<0.000000e+00> : vector<8x128xf32>
    %12 = tpu.matmul %10, %11, %cst_9 {dimension_numbers = #tpu.dot_dimension_numbers<[1], [0], [0], [1], [0, 0, 1, 1], [], []>} : vector<8x128xf32>, vector<128x128xf32>, vector<8x128xf32> -> vector<8x128xf32>
    %c0_10 = arith.constant 0 : index
    %c0_11 = arith.constant 0 : index
    %13 = vector.load %arg5[%c0_10, %c0_11] : memref<1x128xf32, #tpu.memory_space<vmem>>, vector<1x128xf32>
    %14 = vector.broadcast %13 : vector<1x128xf32> to vector<8x128xf32>
    %15 = arith.addf %12, %14 : vector<8x128xf32>
    %cst_12 = arith.constant 0.000000e+00 : f32
    %16 = vector.broadcast %cst_12 : f32 to vector<8x128xf32>
    %17 = arith.cmpf oge, %15, %16 : vector<8x128xf32>
    %cst_13 = arith.constant 2.000000e-01 : f32
    %18 = vector.broadcast %cst_13 : f32 to vector<8x128xf32>
    %19 = arith.mulf %18, %15 : vector<8x128xf32>
    %20 = arith.select %17, %15, %19 : vector<8x128xi1>, vector<8x128xf32>
    %c0_14 = arith.constant 0 : index
    %c0_15 = arith.constant 0 : index
    %21 = vector.load %arg6[%c0_14, %c0_15] : memref<128x128xf32, #tpu.memory_space<vmem>>, vector<128x128xf32>
    %cst_16 = arith.constant dense<0.000000e+00> : vector<8x128xf32>
    %22 = tpu.matmul %20, %21, %cst_16 {dimension_numbers = #tpu.dot_dimension_numbers<[1], [0], [0], [1], [0, 0, 1, 1], [], []>} : vector<8x128xf32>, vector<128x128xf32>, vector<8x128xf32> -> vector<8x128xf32>
    %c0_17 = arith.constant 0 : index
    %c0_18 = arith.constant 0 : index
    %23 = vector.load %arg7[%c0_17, %c0_18] : memref<1x128xf32, #tpu.memory_space<vmem>>, vector<1x128xf32>
    %24 = vector.broadcast %23 : vector<1x128xf32> to vector<8x128xf32>
    %25 = arith.addf %22, %24 : vector<8x128xf32>
    %cst_19 = arith.constant 0.000000e+00 : f32
    %26 = vector.broadcast %cst_19 : f32 to vector<8x128xf32>
    %27 = arith.cmpf oge, %25, %26 : vector<8x128xf32>
    %cst_20 = arith.constant 2.000000e-01 : f32
    %28 = vector.broadcast %cst_20 : f32 to vector<8x128xf32>
    %29 = arith.mulf %28, %25 : vector<8x128xf32>
    %30 = arith.select %27, %25, %29 : vector<8x128xi1>, vector<8x128xf32>
    %c0_21 = arith.constant 0 : index
    %c0_22 = arith.constant 0 : index
    %31 = vector.load %arg8[%c0_21, %c0_22] : memref<128x128xf32, #tpu.memory_space<vmem>>, vector<128x128xf32>
    %cst_23 = arith.constant dense<0.000000e+00> : vector<8x128xf32>
    %32 = tpu.matmul %30, %31, %cst_23 {dimension_numbers = #tpu.dot_dimension_numbers<[1], [0], [0], [1], [0, 0, 1, 1], [], []>} : vector<8x128xf32>, vector<128x128xf32>, vector<8x128xf32> -> vector<8x128xf32>
    %c0_24 = arith.constant 0 : index
    %c0_25 = arith.constant 0 : index
    %33 = vector.load %arg9[%c0_24, %c0_25] : memref<1x128xf32, #tpu.memory_space<vmem>>, vector<1x128xf32>
    %34 = vector.broadcast %33 : vector<1x128xf32> to vector<8x128xf32>
    %35 = arith.addf %32, %34 : vector<8x128xf32>
    %36 = math.tanh %35 : vector<8x128xf32>
    %c0_26 = arith.constant 0 : index
    %c0_27 = arith.constant 0 : index
    %37 = vector.load %arg10[%c0_26, %c0_27] : memref<8x128xf32, #tpu.memory_space<vmem>>, vector<8x128xf32>
    tpu.vector_store %arg10[%c0_26, %c0_27], %36 {strides = array<i32>} : memref<8x128xf32, #tpu.memory_space<vmem>>, vector<8x128xf32>,
    return
  }
  func.func @transform_0(%arg0: i32) -> (i32, i32) {
    %c0_i32 = arith.constant 0 : i32
    %c0_i32_0 = arith.constant 0 : i32
    return %arg0, %c0_i32 : i32, i32
  }
  func.func @transform_1(%arg0: i32) -> (i32, i32) {
    %c0_i32 = arith.constant 0 : i32
    %c0_i32_0 = arith.constant 0 : i32
    %c0_i32_1 = arith.constant 0 : i32
    return %c0_i32, %c0_i32_0 : i32, i32
  }
  func.func @transform_2(%arg0: i32) -> (i32, i32) {
    %c0_i32 = arith.constant 0 : i32
    %c0_i32_0 = arith.constant 0 : i32
    %c0_i32_1 = arith.constant 0 : i32
    return %c0_i32, %c0_i32_0 : i32, i32
  }
  func.func @transform_3(%arg0: i32) -> (i32, i32) {
    %c0_i32 = arith.constant 0 : i32
    %c0_i32_0 = arith.constant 0 : i32
    %c0_i32_1 = arith.constant 0 : i32
    return %c0_i32, %c0_i32_0 : i32, i32
  }
  func.func @transform_4(%arg0: i32) -> (i32, i32) {
    %c0_i32 = arith.constant 0 : i32
    %c0_i32_0 = arith.constant 0 : i32
    %c0_i32_1 = arith.constant 0 : i32
    return %c0_i32, %c0_i32_0 : i32, i32
  }
  func.func @transform_5(%arg0: i32) -> (i32, i32) {
    %c0_i32 = arith.constant 0 : i32
    %c0_i32_0 = arith.constant 0 : i32
    %c0_i32_1 = arith.constant 0 : i32
    return %c0_i32, %c0_i32_0 : i32, i32
  }
  func.func @transform_6(%arg0: i32) -> (i32, i32) {
    %c0_i32 = arith.constant 0 : i32
    %c0_i32_0 = arith.constant 0 : i32
    %c0_i32_1 = arith.constant 0 : i32
    return %c0_i32, %c0_i32_0 : i32, i32
  }
  func.func @transform_7(%arg0: i32) -> (i32, i32) {
    %c0_i32 = arith.constant 0 : i32
    %c0_i32_0 = arith.constant 0 : i32
    %c0_i32_1 = arith.constant 0 : i32
    return %c0_i32, %c0_i32_0 : i32, i32
  }
  func.func @transform_8(%arg0: i32) -> (i32, i32) {
    %c0_i32 = arith.constant 0 : i32
    %c0_i32_0 = arith.constant 0 : i32
    %c0_i32_1 = arith.constant 0 : i32
    return %c0_i32, %c0_i32_0 : i32, i32
  }
  func.func @transform_9(%arg0: i32) -> (i32, i32) {
    %c0_i32 = arith.constant 0 : i32
    %c0_i32_0 = arith.constant 0 : i32
    return %arg0, %c0_i32 : i32, i32
  }
}

</mosaic_0001>

<llo_original>
// kernel: tpu_custom_call.1
$region0: #{tpu_custom_call.1}
  #allocation0 [shape = 'u32[]', space=smem, size = 0x4, offset = 0x4, fixed_abs, tag = 'smem constant byte address 0x4 - core index']
  #allocation1 [shape = 'u32[144,128]{1,0:T(1,128)}', space=vmem, size = 0x12000, scoped, tag = 'internal scratch']
  %s0 = inlined_call_operand.hbm [shape: f32[8,128], index: 0, kind: input, shape index: {}]
  %s1 = inlined_call_operand.hbm [shape: f32[128,128], index: 1, kind: input, shape index: {}]
  %s2 = inlined_call_operand.vmem [shape: f32[1,128], index: 2, kind: input, shape index: {}]
  %s3 = inlined_call_operand.hbm [shape: f32[128,128], index: 3, kind: input, shape index: {}]
  %s4 = inlined_call_operand.vmem [shape: f32[1,128], index: 4, kind: input, shape index: {}]
  %s5 = inlined_call_operand.hbm [shape: f32[128,128], index: 5, kind: input, shape index: {}]
  %s6 = inlined_call_operand.vmem [shape: f32[1,128], index: 6, kind: input, shape index: {}]
  %s7 = inlined_call_operand.hbm [shape: f32[128,128], index: 7, kind: input, shape index: {}]
  %s8 = inlined_call_operand.vmem [shape: f32[1,128], index: 8, kind: input, shape index: {}]
  %s9 = inlined_call_operand.hbm [shape: f32[8,128], index: 9, kind: output, shape index: {}]
  %s10 = sld [smem:[#allocation0]]
  $region66: #{tpu_custom_call.1} parent=0
    _
  %s12 = ssub.s32 1, %s10
  %s13 = scalar_select 0, %s12, %s10
  $region1: #{tpu_custom_call.1} parent=0
    #allocation2 [shape = 'u8[4096]{0}', space=vmem, size = 0x1000, scoped, tag = 'input window, operand 0, single buffered']
    #allocation3 [shape = 's32[1]{0}', space=sflag, size = 0x4, scoped, tag = 'scoped memory for tpu_custom_call.1']
    #allocation4 [shape = 's32[1]{0}', space=sflag, size = 0x4, scoped, tag = 'scoped memory for tpu_custom_call.1']
    #allocation5 [shape = 'u8[65536]{0}', space=vmem, size = 0x10000, scoped, tag = 'input window, operand 1, single buffered']
    #allocation6 [shape = 's32[1]{0}', space=sflag, size = 0x4, scoped, tag = 'scoped memory for tpu_custom_call.1']
    #allocation7 [shape = 'u8[65536]{0}', space=vmem, size = 0x10000, scoped, tag = 'input window, operand 3, single buffered']
    #allocation8 [shape = 'u8[65536]{0}', space=vmem, size = 0x10000, scoped, tag = 'input window, operand 5, single buffered']
    #allocation9 [shape = 's32[1]{0}', space=sflag, size = 0x4, scoped, tag = 'scoped memory for tpu_custom_call.1']
    #allocation10 [shape = 'u8[65536]{0}', space=vmem, size = 0x10000, scoped, tag = 'input window, operand 7, single buffered']
    #allocation11 [shape = 'u8[4096]{0}', space=vmem, size = 0x1000, scoped, tag = 'output window, operand 0, single buffered']
    %14 = vsyncpa [#allocation3], 0
    %15 = vsyncpa [#allocation6], 0
    %16 = vsyncpa [#allocation9], 0
    %17 = vsyncpa [#allocation4], 0
    // Predicated region
    $region2: #{tpu_custom_call.1} parent=1 // pred_check
      _
    $region3: #{tpu_custom_call.1} parent=1 // pred_check_branch
      %19 = sbr.rel (0) target = $region5
    $region4: #{tpu_custom_call.1} parent=1 // pred_region
      %s21 = ssub.s32 128, 128
      %22 = vsyncadd [#allocation3], %s21
      %s24 = sshll.u32 [#allocation2], 4
      %s25 = int_to_ptr.vmem [resolvable:$true] %s24
      %27 = dma.hbm_to_vmem [thread:$0]  %s0, 128, %s25, [#allocation3]
    $region5: #{tpu_custom_call.1} parent=1 // pred_fallthru
      _
    // Predicated region
    $region6: #{tpu_custom_call.1} parent=1 // pred_check
      _
    $region7: #{tpu_custom_call.1} parent=1 // pred_check_branch
      %29 = sbr.rel (0) target = $region9
    $region8: #{tpu_custom_call.1} parent=1 // pred_region
      %s31 = ssub.s32 2048, 2048
      %32 = vsyncadd [#allocation6], %s31
      %s33 = sshll.u32 [#allocation5], 4
      %s34 = int_to_ptr.vmem [resolvable:$true] %s33
      %39 = dma.hbm_to_vmem [thread:$0]  %s1, 2048, %s34, [#allocation6], 128, 128, 8
    $region9: #{tpu_custom_call.1} parent=1 // pred_fallthru
      _
    // Predicated region
    $region10: #{tpu_custom_call.1} parent=1 // pred_check
      _
    $region11: #{tpu_custom_call.1} parent=1 // pred_check_branch
      %41 = sbr.rel (0) target = $region13
    $region12: #{tpu_custom_call.1} parent=1 // pred_region
      _
    $region13: #{tpu_custom_call.1} parent=1 // pred_fallthru
      _
    // Predicated region
    $region14: #{tpu_custom_call.1} parent=1 // pred_check
      _
    $region15: #{tpu_custom_call.1} parent=1 // pred_check_branch
      %43 = sbr.rel (0) target = $region17
    $region16: #{tpu_custom_call.1} parent=1 // pred_region
      %s45 = ssub.s32 2048, 2048
      %46 = vsyncadd [#allocation6], %s45
      %s47 = sshll.u32 [#allocation7], 4
      %s48 = int_to_ptr.vmem [resolvable:$true] %s47
      %53 = dma.hbm_to_vmem [thread:$0]  %s3, 2048, %s48, [#allocation6], 128, 128, 8
    $region17: #{tpu_custom_call.1} parent=1 // pred_fallthru
      _
    // Predicated region
    $region18: #{tpu_custom_call.1} parent=1 // pred_check
      _
    $region19: #{tpu_custom_call.1} parent=1 // pred_check_branch
      %55 = sbr.rel (0) target = $region21
    $region20: #{tpu_custom_call.1} parent=1 // pred_region
      _
    $region21: #{tpu_custom_call.1} parent=1 // pred_fallthru
      _
    // Predicated region
    $region22: #{tpu_custom_call.1} parent=1 // pred_check
      _
    $region23: #{tpu_custom_call.1} parent=1 // pred_check_branch
      %57 = sbr.rel (0) target = $region25
    $region24: #{tpu_custom_call.1} parent=1 // pred_region
      %s59 = ssub.s32 2048, 2048
      %60 = vsyncadd [#allocation9], %s59
      %s61 = sshll.u32 [#allocation8], 4
      %s62 = int_to_ptr.vmem [resolvable:$true] %s61
      %67 = dma.hbm_to_vmem [thread:$0]  %s5, 2048, %s62, [#allocation9], 128, 128, 8
    $region25: #{tpu_custom_call.1} parent=1 // pred_fallthru
      _
    // Predicated region
    $region26: #{tpu_custom_call.1} parent=1 // pred_check
      _
    $region27: #{tpu_custom_call.1} parent=1 // pred_check_branch
      %69 = sbr.rel (0) target = $region29
    $region28: #{tpu_custom_call.1} parent=1 // pred_region
      _
    $region29: #{tpu_custom_call.1} parent=1 // pred_fallthru
      _
    // Predicated region
    $region30: #{tpu_custom_call.1} parent=1 // pred_check
      _
    $region31: #{tpu_custom_call.1} parent=1 // pred_check_branch
      %71 = sbr.rel (0) target = $region33
    $region32: #{tpu_custom_call.1} parent=1 // pred_region
      %s73 = ssub.s32 2048, 2048
      %74 = vsyncadd [#allocation9], %s73
      %s75 = sshll.u32 [#allocation10], 4
      %s76 = int_to_ptr.vmem [resolvable:$true] %s75
      %81 = dma.hbm_to_vmem [thread:$0]  %s7, 2048, %s76, [#allocation9], 128, 128, 8
    $region33: #{tpu_custom_call.1} parent=1 // pred_fallthru
      _
    // Predicated region
    $region34: #{tpu_custom_call.1} parent=1 // pred_check
      _
    $region35: #{tpu_custom_call.1} parent=1 // pred_check_branch
      %83 = sbr.rel (0) target = $region37
    $region36: #{tpu_custom_call.1} parent=1 // pred_region
      _
    $region37: #{tpu_custom_call.1} parent=1 // pred_fallthru
      _
    // Predicated region
    $region38: #{tpu_custom_call.1} parent=1 // pred_check
      _
    $region39: #{tpu_custom_call.1} parent=1 // pred_check_branch
      %85 = sbr.rel (0) target = $region41
    $region40: #{tpu_custom_call.1} parent=1 // pred_region
      %86 = dma.done [#allocation3], 128
    $region41: #{tpu_custom_call.1} parent=1 // pred_fallthru
      _
    // Predicated region
    $region42: #{tpu_custom_call.1} parent=1 // pred_check
      _
    $region43: #{tpu_custom_call.1} parent=1 // pred_check_branch
      %88 = sbr.rel (0) target = $region45
    $region44: #{tpu_custom_call.1} parent=1 // pred_region
      %89 = dma.done [#allocation6], 2048
    $region45: #{tpu_custom_call.1} parent=1 // pred_fallthru
      _
    // Predicated region
    $region46: #{tpu_custom_call.1} parent=1 // pred_check
      _
    $region47: #{tpu_custom_call.1} parent=1 // pred_check_branch
      %91 = sbr.rel (0) target = $region49
    $region48: #{tpu_custom_call.1} parent=1 // pred_region
      %92 = dma.done [#allocation6], 2048
    $region49: #{tpu_custom_call.1} parent=1 // pred_fallthru
      _
    // Predicated region
    $region50: #{tpu_custom_call.1} parent=1 // pred_check
      _
    $region51: #{tpu_custom_call.1} parent=1 // pred_check_branch
      %94 = sbr.rel (0) target = $region53
    $region52: #{tpu_custom_call.1} parent=1 // pred_region
      %95 = dma.done [#allocation9], 2048
    $region53: #{tpu_custom_call.1} parent=1 // pred_fallthru
      _
    // Predicated region
    $region54: #{tpu_custom_call.1} parent=1 // pred_check
      _
    $region55: #{tpu_custom_call.1} parent=1 // pred_check_branch
      %97 = sbr.rel (0) target = $region57
    $region56: #{tpu_custom_call.1} parent=1 // pred_region
      %98 = dma.done [#allocation9], 2048
    $region57: #{tpu_custom_call.1} parent=1 // pred_fallthru
      _
    %v99 = vld [vmem:[#allocation2] sm:$0xff]
    %v100 = vld [vmem:[#allocation5] sm:$0xff]
    %v101 = vld [vmem:[#allocation5 + $0x8] sm:$0xff]
    %v102 = vld [vmem:[#allocation5 + $0x10] sm:$0xff]
    %v103 = vld [vmem:[#allocation5 + $0x18] sm:$0xff]
    %v104 = vld [vmem:[#allocation5 + $0x20] sm:$0xff]
    %v105 = vld [vmem:[#allocation5 + $0x28] sm:$0xff]
    %v106 = vld [vmem:[#allocation5 + $0x30] sm:$0xff]
    %v107 = vld [vmem:[#allocation5 + $0x38] sm:$0xff]
    %v108 = vld [vmem:[#allocation5 + $0x40] sm:$0xff]
    %v109 = vld [vmem:[#allocation5 + $0x48] sm:$0xff]
    %v110 = vld [vmem:[#allocation5 + $0x50] sm:$0xff]
    %v111 = vld [vmem:[#allocation5 + $0x58] sm:$0xff]
    %v112 = vld [vmem:[#allocation5 + $0x60] sm:$0xff]
    %v113 = vld [vmem:[#allocation5 + $0x68] sm:$0xff]
    %v114 = vld [vmem:[#allocation5 + $0x70] sm:$0xff]
    %v115 = vld [vmem:[#allocation5 + $0x78] sm:$0xff]
    %v116 = vld [vmem:[%s2] sm:$0x1]
    %v118 = vlaneseq
    %v119 = vshrl.u32 %v118, 7
    %v120 = vsub.s32 0, %v119
    %v121 = vrot.slane %v116, %v120
    %123 = vmatprep.subr.mxu0 0.0
    %124 = vmatpush1.msra.mxu0 %v100
    %125 = vmatprep.subr.mxu0 0.0
    %126 = vmatpush1.msra.mxu0 %v101
    %127 = vmatprep.subr.mxu0 0.0
    %128 = vmatpush1.msra.mxu0 %v102
    %129 = vmatprep.subr.mxu0 0.0
    %130 = vmatpush1.msra.mxu0 %v103
    %131 = vmatprep.subr.mxu0 0.0
    %132 = vmatpush1.msra.mxu0 %v104
    %133 = vmatprep.subr.mxu0 0.0
    %134 = vmatpush1.msra.mxu0 %v105
    %135 = vmatprep.subr.mxu0 0.0
    %136 = vmatpush1.msra.mxu0 %v106
    %137 = vmatprep.subr.mxu0 0.0
    %138 = vmatpush1.msra.mxu0 %v107
    %139 = vmatprep.subr.mxu0 0.0
    %140 = vmatpush1.msra.mxu0 %v108
    %141 = vmatprep.subr.mxu0 0.0
    %142 = vmatpush1.msra.mxu0 %v109
    %143 = vmatprep.subr.mxu0 0.0
    %144 = vmatpush1.msra.mxu0 %v110
    %145 = vmatprep.subr.mxu0 0.0
    %146 = vmatpush1.msra.mxu0 %v111
    %147 = vmatprep.subr.mxu0 0.0
    %148 = vmatpush1.msra.mxu0 %v112
    %149 = vmatprep.subr.mxu0 0.0
    %150 = vmatpush1.msra.mxu0 %v113
    %151 = vmatprep.subr.mxu0 0.0
    %152 = vmatpush1.msra.mxu0 %v114
    %153 = vmatprep.subr.mxu0 0.0
    %154 = vmatpush1.msra.mxu0 %v115
    %155 = vmatprep.subr.mxu0 0.0
    %156 = vmatpush1.msra.mxu0 0.0
    %157 = vmatprep.subr.mxu0 0.0
    %158 = vmatpush1.msra.mxu0 0.0
    %159 = vmatprep.subr.mxu0 0.0
    %160 = vmatpush1.msra.mxu0 0.0
    %161 = vmatprep.subr.mxu0 0.0
    %162 = vmatpush1.msra.mxu0 0.0
    %163 = vmatprep.subr.mxu0 0.0
    %164 = vmatpush1.msra.mxu0 0.0
    %165 = vmatprep.subr.mxu0 0.0
    %166 = vmatpush1.msra.mxu0 0.0
    %167 = vmatprep.subr.mxu0 0.0
    %168 = vmatpush1.msra.mxu0 0.0
    %169 = vmatprep.subr.mxu0 0.0
    %170 = vmatpush1.msra.mxu0 0.0
    %171 = vmatprep.subr.mxu0 0.0
    %172 = vmatpush1.msra.mxu0 0.0
    %173 = vmatprep.subr.mxu0 0.0
    %174 = vmatpush1.msra.mxu0 0.0
    %175 = vmatprep.subr.mxu0 0.0
    %176 = vmatpush1.msra.mxu0 0.0
    %177 = vmatprep.subr.mxu0 0.0
    %178 = vmatpush1.msra.mxu0 0.0
    %179 = vmatprep.subr.mxu0 0.0
    %180 = vmatpush1.msra.mxu0 0.0
    %181 = vmatprep.subr.mxu0 0.0
    %182 = vmatpush1.msra.mxu0 0.0
    %183 = vmatprep.subr.mxu0 0.0
    %184 = vmatpush1.msra.mxu0 0.0
    %185 = vmatprep.subr.mxu0 0.0
    %186 = vmatpush1.msra.mxu0 0.0
    %187 = vmatprep.mubr.f32.mxu0 0.0
    %188 = vmatmul.mubr.f32.gmra.mrb[0].mxu0 %v99
    %v189 = vpop.f32.mrb[0].mxu0
    %v190 = vadd.f32 %v121, %v189
    %v191 = vpop.f32.mrb[0].mxu0
    %192 = vdwg.mxu0
    %vm193 = vcmp.ge.f32.partialorder %v190, 0.0
    %v194 = vmul.f32 %v190, 0.2
    %v195 = vsel %vm193, %v190, %v194
    %v196 = vld [vmem:[#allocation7] sm:$0xff]
    %v197 = vld [vmem:[#allocation7 + $0x8] sm:$0xff]
    %v198 = vld [vmem:[#allocation7 + $0x10] sm:$0xff]
    %v199 = vld [vmem:[#allocation7 + $0x18] sm:$0xff]
    %v200 = vld [vmem:[#allocation7 + $0x20] sm:$0xff]
    %v201 = vld [vmem:[#allocation7 + $0x28] sm:$0xff]
    %v202 = vld [vmem:[#allocation7 + $0x30] sm:$0xff]
    %v203 = vld [vmem:[#allocation7 + $0x38] sm:$0xff]
    %v204 = vld [vmem:[#allocation7 + $0x40] sm:$0xff]
    %v205 = vld [vmem:[#allocation7 + $0x48] sm:$0xff]
    %v206 = vld [vmem:[#allocation7 + $0x50] sm:$0xff]
    %v207 = vld [vmem:[#allocation7 + $0x58] sm:$0xff]
    %v208 = vld [vmem:[#allocation7 + $0x60] sm:$0xff]
    %v209 = vld [vmem:[#allocation7 + $0x68] sm:$0xff]
    %v210 = vld [vmem:[#allocation7 + $0x70] sm:$0xff]
    %v211 = vld [vmem:[#allocation7 + $0x78] sm:$0xff]
    %v212 = vld [vmem:[%s4] sm:$0x1]
    %v214 = vlaneseq
    %v215 = vshrl.u32 %v214, 7
    %v216 = vsub.s32 0, %v215
    %v217 = vrot.slane %v212, %v216
    %219 = vmatprep.subr.mxu0 0.0
    %220 = vmatpush1.msra.mxu0 %v196
    %221 = vmatprep.subr.mxu0 0.0
    %222 = vmatpush1.msra.mxu0 %v197
    %223 = vmatprep.subr.mxu0 0.0
    %224 = vmatpush1.msra.mxu0 %v198
    %225 = vmatprep.subr.mxu0 0.0
    %226 = vmatpush1.msra.mxu0 %v199
    %227 = vmatprep.subr.mxu0 0.0
    %228 = vmatpush1.msra.mxu0 %v200
    %229 = vmatprep.subr.mxu0 0.0
    %230 = vmatpush1.msra.mxu0 %v201
    %231 = vmatprep.subr.mxu0 0.0
    %232 = vmatpush1.msra.mxu0 %v202
    %233 = vmatprep.subr.mxu0 0.0
    %234 = vmatpush1.msra.mxu0 %v203
    %235 = vmatprep.subr.mxu0 0.0
    %236 = vmatpush1.msra.mxu0 %v204
    %237 = vmatprep.subr.mxu0 0.0
    %238 = vmatpush1.msra.mxu0 %v205
    %239 = vmatprep.subr.mxu0 0.0
    %240 = vmatpush1.msra.mxu0 %v206
    %241 = vmatprep.subr.mxu0 0.0
    %242 = vmatpush1.msra.mxu0 %v207
    %243 = vmatprep.subr.mxu0 0.0
    %244 = vmatpush1.msra.mxu0 %v208
    %245 = vmatprep.subr.mxu0 0.0
    %246 = vmatpush1.msra.mxu0 %v209
    %247 = vmatprep.subr.mxu0 0.0
    %248 = vmatpush1.msra.mxu0 %v210
    %249 = vmatprep.subr.mxu0 0.0
    %250 = vmatpush1.msra.mxu0 %v211
    %251 = vmatprep.subr.mxu0 0.0
    %252 = vmatpush1.msra.mxu0 0.0
    %253 = vmatprep.subr.mxu0 0.0
    %254 = vmatpush1.msra.mxu0 0.0
    %255 = vmatprep.subr.mxu0 0.0
    %256 = vmatpush1.msra.mxu0 0.0
    %257 = vmatprep.subr.mxu0 0.0
    %258 = vmatpush1.msra.mxu0 0.0
    %259 = vmatprep.subr.mxu0 0.0
    %260 = vmatpush1.msra.mxu0 0.0
    %261 = vmatprep.subr.mxu0 0.0
    %262 = vmatpush1.msra.mxu0 0.0
    %263 = vmatprep.subr.mxu0 0.0
    %264 = vmatpush1.msra.mxu0 0.0
    %265 = vmatprep.subr.mxu0 0.0
    %266 = vmatpush1.msra.mxu0 0.0
    %267 = vmatprep.subr.mxu0 0.0
    %268 = vmatpush1.msra.mxu0 0.0
    %269 = vmatprep.subr.mxu0 0.0
    %270 = vmatpush1.msra.mxu0 0.0
    %271 = vmatprep.subr.mxu0 0.0
    %272 = vmatpush1.msra.mxu0 0.0
    %273 = vmatprep.subr.mxu0 0.0
    %274 = vmatpush1.msra.mxu0 0.0
    %275 = vmatprep.subr.mxu0 0.0
    %276 = vmatpush1.msra.mxu0 0.0
    %277 = vmatprep.subr.mxu0 0.0
    %278 = vmatpush1.msra.mxu0 0.0
    %279 = vmatprep.subr.mxu0 0.0
    %280 = vmatpush1.msra.mxu0 0.0
    %281 = vmatprep.subr.mxu0 0.0
    %282 = vmatpush1.msra.mxu0 0.0
    %283 = vmatprep.mubr.f32.mxu0 0.0
    %284 = vmatmul.mubr.f32.gmra.mrb[0].mxu0 %v195
    %v285 = vpop.f32.mrb[0].mxu0
    %v286 = vadd.f32 %v217, %v285
    %v287 = vpop.f32.mrb[0].mxu0
    %288 = vdwg.mxu0
    %vm289 = vcmp.ge.f32.partialorder %v286, 0.0
    %v290 = vmul.f32 %v286, 0.2
    %v291 = vsel %vm289, %v286, %v290
    %v292 = vld [vmem:[#allocation8] sm:$0xff]
    %v293 = vld [vmem:[#allocation8 + $0x8] sm:$0xff]
    %v294 = vld [vmem:[#allocation8 + $0x10] sm:$0xff]
    %v295 = vld [vmem:[#allocation8 + $0x18] sm:$0xff]
    %v296 = vld [vmem:[#allocation8 + $0x20] sm:$0xff]
    %v297 = vld [vmem:[#allocation8 + $0x28] sm:$0xff]
    %v298 = vld [vmem:[#allocation8 + $0x30] sm:$0xff]
    %v299 = vld [vmem:[#allocation8 + $0x38] sm:$0xff]
    %v300 = vld [vmem:[#allocation8 + $0x40] sm:$0xff]
    %v301 = vld [vmem:[#allocation8 + $0x48] sm:$0xff]
    %v302 = vld [vmem:[#allocation8 + $0x50] sm:$0xff]
    %v303 = vld [vmem:[#allocation8 + $0x58] sm:$0xff]
    %v304 = vld [vmem:[#allocation8 + $0x60] sm:$0xff]
    %v305 = vld [vmem:[#allocation8 + $0x68] sm:$0xff]
    %v306 = vld [vmem:[#allocation8 + $0x70] sm:$0xff]
    %v307 = vld [vmem:[#allocation8 + $0x78] sm:$0xff]
    %v308 = vld [vmem:[%s6] sm:$0x1]
    %v310 = vlaneseq
    %v311 = vshrl.u32 %v310, 7
    %v312 = vsub.s32 0, %v311
    %v313 = vrot.slane %v308, %v312
    %315 = vmatprep.subr.mxu0 0.0
    %316 = vmatpush1.msra.mxu0 %v292
    %317 = vmatprep.subr.mxu0 0.0
    %318 = vmatpush1.msra.mxu0 %v293
    %319 = vmatprep.subr.mxu0 0.0
    %320 = vmatpush1.msra.mxu0 %v294
    %321 = vmatprep.subr.mxu0 0.0
    %322 = vmatpush1.msra.mxu0 %v295
    %323 = vmatprep.subr.mxu0 0.0
    %324 = vmatpush1.msra.mxu0 %v296
    %325 = vmatprep.subr.mxu0 0.0
    %326 = vmatpush1.msra.mxu0 %v297
    %327 = vmatprep.subr.mxu0 0.0
    %328 = vmatpush1.msra.mxu0 %v298
    %329 = vmatprep.subr.mxu0 0.0
    %330 = vmatpush1.msra.mxu0 %v299
    %331 = vmatprep.subr.mxu0 0.0
    %332 = vmatpush1.msra.mxu0 %v300
    %333 = vmatprep.subr.mxu0 0.0
    %334 = vmatpush1.msra.mxu0 %v301
    %335 = vmatprep.subr.mxu0 0.0
    %336 = vmatpush1.msra.mxu0 %v302
    %337 = vmatprep.subr.mxu0 0.0
    %338 = vmatpush1.msra.mxu0 %v303
    %339 = vmatprep.subr.mxu0 0.0
    %340 = vmatpush1.msra.mxu0 %v304
    %341 = vmatprep.subr.mxu0 0.0
    %342 = vmatpush1.msra.mxu0 %v305
    %343 = vmatprep.subr.mxu0 0.0
    %344 = vmatpush1.msra.mxu0 %v306
    %345 = vmatprep.subr.mxu0 0.0
    %346 = vmatpush1.msra.mxu0 %v307
    %347 = vmatprep.subr.mxu0 0.0
    %348 = vmatpush1.msra.mxu0 0.0
    %349 = vmatprep.subr.mxu0 0.0
    %350 = vmatpush1.msra.mxu0 0.0
    %351 = vmatprep.subr.mxu0 0.0
    %352 = vmatpush1.msra.mxu0 0.0
    %353 = vmatprep.subr.mxu0 0.0
    %354 = vmatpush1.msra.mxu0 0.0
    %355 = vmatprep.subr.mxu0 0.0
    %356 = vmatpush1.msra.mxu0 0.0
    %357 = vmatprep.subr.mxu0 0.0
    %358 = vmatpush1.msra.mxu0 0.0
    %359 = vmatprep.subr.mxu0 0.0
    %360 = vmatpush1.msra.mxu0 0.0
    %361 = vmatprep.subr.mxu0 0.0
    %362 = vmatpush1.msra.mxu0 0.0
    %363 = vmatprep.subr.mxu0 0.0
    %364 = vmatpush1.msra.mxu0 0.0
    %365 = vmatprep.subr.mxu0 0.0
    %366 = vmatpush1.msra.mxu0 0.0
    %367 = vmatprep.subr.mxu0 0.0
    %368 = vmatpush1.msra.mxu0 0.0
    %369 = vmatprep.subr.mxu0 0.0
    %370 = vmatpush1.msra.mxu0 0.0
    %371 = vmatprep.subr.mxu0 0.0
    %372 = vmatpush1.msra.mxu0 0.0
    %373 = vmatprep.subr.mxu0 0.0
    %374 = vmatpush1.msra.mxu0 0.0
    %375 = vmatprep.subr.mxu0 0.0
    %376 = vmatpush1.msra.mxu0 0.0
    %377 = vmatprep.subr.mxu0 0.0
    %378 = vmatpush1.msra.mxu0 0.0
    %379 = vmatprep.mubr.f32.mxu0 0.0
    %380 = vmatmul.mubr.f32.gmra.mrb[0].mxu0 %v291
    %v381 = vpop.f32.mrb[0].mxu0
    %v382 = vadd.f32 %v313, %v381
    %v383 = vpop.f32.mrb[0].mxu0
    %384 = vdwg.mxu0
    %vm385 = vcmp.ge.f32.partialorder %v382, 0.0
    %v386 = vmul.f32 %v382, 0.2
    %v387 = vsel %vm385, %v382, %v386
    %v388 = vld [vmem:[#allocation10] sm:$0xff]
    %v389 = vld [vmem:[#allocation10 + $0x8] sm:$0xff]
    %v390 = vld [vmem:[#allocation10 + $0x10] sm:$0xff]
    %v391 = vld [vmem:[#allocation10 + $0x18] sm:$0xff]
    %v392 = vld [vmem:[#allocation10 + $0x20] sm:$0xff]
    %v393 = vld [vmem:[#allocation10 + $0x28] sm:$0xff]
    %v394 = vld [vmem:[#allocation10 + $0x30] sm:$0xff]
    %v395 = vld [vmem:[#allocation10 + $0x38] sm:$0xff]
    %v396 = vld [vmem:[#allocation10 + $0x40] sm:$0xff]
    %v397 = vld [vmem:[#allocation10 + $0x48] sm:$0xff]
    %v398 = vld [vmem:[#allocation10 + $0x50] sm:$0xff]
    %v399 = vld [vmem:[#allocation10 + $0x58] sm:$0xff]
    %v400 = vld [vmem:[#allocation10 + $0x60] sm:$0xff]
    %v401 = vld [vmem:[#allocation10 + $0x68] sm:$0xff]
    %v402 = vld [vmem:[#allocation10 + $0x70] sm:$0xff]
    %v403 = vld [vmem:[#allocation10 + $0x78] sm:$0xff]
    %v404 = vld [vmem:[%s8] sm:$0x1]
    %v406 = vlaneseq
    %v407 = vshrl.u32 %v406, 7
    %v408 = vsub.s32 0, %v407
    %v409 = vrot.slane %v404, %v408
    %411 = vmatprep.subr.mxu0 0.0
    %412 = vmatpush1.msra.mxu0 %v388
    %413 = vmatprep.subr.mxu0 0.0
    %414 = vmatpush1.msra.mxu0 %v389
    %415 = vmatprep.subr.mxu0 0.0
    %416 = vmatpush1.msra.mxu0 %v390
    %417 = vmatprep.subr.mxu0 0.0
    %418 = vmatpush1.msra.mxu0 %v391
    %419 = vmatprep.subr.mxu0 0.0
    %420 = vmatpush1.msra.mxu0 %v392
    %421 = vmatprep.subr.mxu0 0.0
    %422 = vmatpush1.msra.mxu0 %v393
    %423 = vmatprep.subr.mxu0 0.0
    %424 = vmatpush1.msra.mxu0 %v394
    %425 = vmatprep.subr.mxu0 0.0
    %426 = vmatpush1.msra.mxu0 %v395
    %427 = vmatprep.subr.mxu0 0.0
    %428 = vmatpush1.msra.mxu0 %v396
    %429 = vmatprep.subr.mxu0 0.0
    %430 = vmatpush1.msra.mxu0 %v397
    %431 = vmatprep.subr.mxu0 0.0
    %432 = vmatpush1.msra.mxu0 %v398
    %433 = vmatprep.subr.mxu0 0.0
    %434 = vmatpush1.msra.mxu0 %v399
    %435 = vmatprep.subr.mxu0 0.0
    %436 = vmatpush1.msra.mxu0 %v400
    %437 = vmatprep.subr.mxu0 0.0
    %438 = vmatpush1.msra.mxu0 %v401
    %439 = vmatprep.subr.mxu0 0.0
    %440 = vmatpush1.msra.mxu0 %v402
    %441 = vmatprep.subr.mxu0 0.0
    %442 = vmatpush1.msra.mxu0 %v403
    %443 = vmatprep.subr.mxu0 0.0
    %444 = vmatpush1.msra.mxu0 0.0
    %445 = vmatprep.subr.mxu0 0.0
    %446 = vmatpush1.msra.mxu0 0.0
    %447 = vmatprep.subr.mxu0 0.0
    %448 = vmatpush1.msra.mxu0 0.0
    %449 = vmatprep.subr.mxu0 0.0
    %450 = vmatpush1.msra.mxu0 0.0
    %451 = vmatprep.subr.mxu0 0.0
    %452 = vmatpush1.msra.mxu0 0.0
    %453 = vmatprep.subr.mxu0 0.0
    %454 = vmatpush1.msra.mxu0 0.0
    %455 = vmatprep.subr.mxu0 0.0
    %456 = vmatpush1.msra.mxu0 0.0
    %457 = vmatprep.subr.mxu0 0.0
    %458 = vmatpush1.msra.mxu0 0.0
    %459 = vmatprep.subr.mxu0 0.0
    %460 = vmatpush1.msra.mxu0 0.0
    %461 = vmatprep.subr.mxu0 0.0
    %462 = vmatpush1.msra.mxu0 0.0
    %463 = vmatprep.subr.mxu0 0.0
    %464 = vmatpush1.msra.mxu0 0.0
    %465 = vmatprep.subr.mxu0 0.0
    %466 = vmatpush1.msra.mxu0 0.0
    %467 = vmatprep.subr.mxu0 0.0
    %468 = vmatpush1.msra.mxu0 0.0
    %469 = vmatprep.subr.mxu0 0.0
    %470 = vmatpush1.msra.mxu0 0.0
    %471 = vmatprep.subr.mxu0 0.0
    %472 = vmatpush1.msra.mxu0 0.0
    %473 = vmatprep.subr.mxu0 0.0
    %474 = vmatpush1.msra.mxu0 0.0
    %475 = vmatprep.mubr.f32.mxu0 0.0
    %476 = vmatmul.mubr.f32.gmra.mrb[0].mxu0 %v387
    %v477 = vpop.f32.mrb[0].mxu0
    %v478 = vadd.f32 %v409, %v477
    %v479 = vpop.f32.mrb[0].mxu0
    %480 = vdwg.mxu0
    %v481 = vtanh.pop %v478
    %482 = vst [vmem:[#allocation11] sm:$0xff] %v481
    // Predicated region
    $region58: #{tpu_custom_call.1} parent=1 // pred_check
      _
    $region59: #{tpu_custom_call.1} parent=1 // pred_check_branch
      %484 = sbr.rel (0) target = $region61
    $region60: #{tpu_custom_call.1} parent=1 // pred_region
      %s486 = ssub.s32 128, 128
      %487 = vsyncadd [#allocation4], %s486
      %s489 = sshll.u32 [#allocation11], 4
      %s490 = int_to_ptr.vmem [resolvable:$true] %s489
      %492 = dma.vmem_to_hbm [thread:$0]  %s490, 128, %s9, [#allocation4]
    $region61: #{tpu_custom_call.1} parent=1 // pred_fallthru
      _
    // Predicated region
    $region62: #{tpu_custom_call.1} parent=1 // pred_check
      _
    $region63: #{tpu_custom_call.1} parent=1 // pred_check_branch
      %494 = sbr.rel (0) target = $region65
    $region64: #{tpu_custom_call.1} parent=1 // pred_region
      %495 = dma.done [#allocation4], 128
    $region65: #{tpu_custom_call.1} parent=1 // pred_fallthru
      _
    %496 = vsyncpa [#allocation3], 1
    %497 = vsyncpa [#allocation6], 1
    %498 = vsyncpa [#allocation9], 1
    %499 = vsyncpa [#allocation4], 1

// kernel: tpu_custom_call.1
$region0: #{tpu_custom_call.1}
  #allocation0 [shape = 'u32[]', space=smem, size = 0x4, offset = 0x4, fixed_abs, tag = 'smem constant byte address 0x4 - core index']
  #allocation1 [shape = 'u32[144,128]{1,0:T(1,128)}', space=vmem, size = 0x12000, scoped, tag = 'internal scratch']
  %s0 = inlined_call_operand.hbm [shape: f32[8,128], index: 0, kind: input, shape index: {}]
  %s1 = inlined_call_operand.hbm [shape: f32[128,128], index: 1, kind: input, shape index: {}]
  %s2 = inlined_call_operand.vmem [shape: f32[1,128], index: 2, kind: input, shape index: {}]
  %s3 = inlined_call_operand.hbm [shape: f32[128,128], index: 3, kind: input, shape index: {}]
  %s4 = inlined_call_operand.vmem [shape: f32[1,128], index: 4, kind: input, shape index: {}]
  %s5 = inlined_call_operand.hbm [shape: f32[128,128], index: 5, kind: input, shape index: {}]
  %s6 = inlined_call_operand.vmem [shape: f32[1,128], index: 6, kind: input, shape index: {}]
  %s7 = inlined_call_operand.hbm [shape: f32[128,128], index: 7, kind: input, shape index: {}]
  %s8 = inlined_call_operand.vmem [shape: f32[1,128], index: 8, kind: input, shape index: {}]
  %s9 = inlined_call_operand.hbm [shape: f32[8,128], index: 9, kind: output, shape index: {}]
  %s10 = sld [smem:[#allocation0]]
  $region66: #{tpu_custom_call.1} parent=0
    _
  %s12 = ssub.s32 1, %s10
  %s13 = scalar_select 0, %s12, %s10
  $region1: #{tpu_custom_call.1} parent=0
    #allocation2 [shape = 'u8[4096]{0}', space=vmem, size = 0x1000, scoped, tag = 'input window, operand 0, single buffered']
    #allocation3 [shape = 's32[1]{0}', space=sflag, size = 0x4, scoped, tag = 'scoped memory for tpu_custom_call.1']
    #allocation4 [shape = 's32[1]{0}', space=sflag, size = 0x4, scoped, tag = 'scoped memory for tpu_custom_call.1']
    #allocation5 [shape = 'u8[65536]{0}', space=vmem, size = 0x10000, scoped, tag = 'input window, operand 1, single buffered']
    #allocation6 [shape = 's32[1]{0}', space=sflag, size = 0x4, scoped, tag = 'scoped memory for tpu_custom_call.1']
    #allocation7 [shape = 'u8[65536]{0}', space=vmem, size = 0x10000, scoped, tag = 'input window, operand 3, single buffered']
    #allocation8 [shape = 'u8[65536]{0}', space=vmem, size = 0x10000, scoped, tag = 'input window, operand 5, single buffered']
    #allocation9 [shape = 's32[1]{0}', space=sflag, size = 0x4, scoped, tag = 'scoped memory for tpu_custom_call.1']
    #allocation10 [shape = 'u8[65536]{0}', space=vmem, size = 0x10000, scoped, tag = 'input window, operand 7, single buffered']
    #allocation11 [shape = 'u8[4096]{0}', space=vmem, size = 0x1000, scoped, tag = 'output window, operand 0, single buffered']
    %14 = vsyncpa [#allocation3], 0
    %15 = vsyncpa [#allocation6], 0
    %16 = vsyncpa [#allocation9], 0
    %17 = vsyncpa [#allocation4], 0
    // Predicated region
    $region2: #{tpu_custom_call.1} parent=1 // pred_check
      _
    $region3: #{tpu_custom_call.1} parent=1 // pred_check_branch
      %19 = sbr.rel (0) target = $region5
    $region4: #{tpu_custom_call.1} parent=1 // pred_region
      %s21 = ssub.s32 128, 128
      %22 = vsyncadd [#allocation3], %s21
      %s24 = sshll.u32 [#allocation2], 4
      %s25 = int_to_ptr.vmem [resolvable:$true] %s24
      %27 = dma.hbm_to_vmem [thread:$0]  %s0, 128, %s25, [#allocation3]
    $region5: #{tpu_custom_call.1} parent=1 // pred_fallthru
      _
    // Predicated region
    $region6: #{tpu_custom_call.1} parent=1 // pred_check
      _
    $region7: #{tpu_custom_call.1} parent=1 // pred_check_branch
      %29 = sbr.rel (0) target = $region9
    $region8: #{tpu_custom_call.1} parent=1 // pred_region
      %s31 = ssub.s32 2048, 2048
      %32 = vsyncadd [#allocation6], %s31
      %s33 = sshll.u32 [#allocation5], 4
      %s34 = int_to_ptr.vmem [resolvable:$true] %s33
      %39 = dma.hbm_to_vmem [thread:$0]  %s1, 2048, %s34, [#allocation6], 128, 128, 8
    $region9: #{tpu_custom_call.1} parent=1 // pred_fallthru
      _
    // Predicated region
    $region10: #{tpu_custom_call.1} parent=1 // pred_check
      _
    $region11: #{tpu_custom_call.1} parent=1 // pred_check_branch
      %41 = sbr.rel (0) target = $region13
    $region12: #{tpu_custom_call.1} parent=1 // pred_region
      _
    $region13: #{tpu_custom_call.1} parent=1 // pred_fallthru
      _
    // Predicated region
    $region14: #{tpu_custom_call.1} parent=1 // pred_check
      _
    $region15: #{tpu_custom_call.1} parent=1 // pred_check_branch
      %43 = sbr.rel (0) target = $region17
    $region16: #{tpu_custom_call.1} parent=1 // pred_region
      %s45 = ssub.s32 2048, 2048
      %46 = vsyncadd [#allocation6], %s45
      %s47 = sshll.u32 [#allocation7], 4
      %s48 = int_to_ptr.vmem [resolvable:$true] %s47
      %53 = dma.hbm_to_vmem [thread:$0]  %s3, 2048, %s48, [#allocation6], 128, 128, 8
    $region17: #{tpu_custom_call.1} parent=1 // pred_fallthru
      _
    // Predicated region
    $region18: #{tpu_custom_call.1} parent=1 // pred_check
      _
    $region19: #{tpu_custom_call.1} parent=1 // pred_check_branch
      %55 = sbr.rel (0) target = $region21
    $region20: #{tpu_custom_call.1} parent=1 // pred_region
      _
    $region21: #{tpu_custom_call.1} parent=1 // pred_fallthru
      _
    // Predicated region
    $region22: #{tpu_custom_call.1} parent=1 // pred_check
      _
    $region23: #{tpu_custom_call.1} parent=1 // pred_check_branch
      %57 = sbr.rel (0) target = $region25
    $region24: #{tpu_custom_call.1} parent=1 // pred_region
      %s59 = ssub.s32 2048, 2048
      %60 = vsyncadd [#allocation9], %s59
      %s61 = sshll.u32 [#allocation8], 4
      %s62 = int_to_ptr.vmem [resolvable:$true] %s61
      %67 = dma.hbm_to_vmem [thread:$0]  %s5, 2048, %s62, [#allocation9], 128, 128, 8
    $region25: #{tpu_custom_call.1} parent=1 // pred_fallthru
      _
    // Predicated region
    $region26: #{tpu_custom_call.1} parent=1 // pred_check
      _
    $region27: #{tpu_custom_call.1} parent=1 // pred_check_branch
      %69 = sbr.rel (0) target = $region29
    $region28: #{tpu_custom_call.1} parent=1 // pred_region
      _
    $region29: #{tpu_custom_call.1} parent=1 // pred_fallthru
      _
    // Predicated region
    $region30: #{tpu_custom_call.1} parent=1 // pred_check
      _
    $region31: #{tpu_custom_call.1} parent=1 // pred_check_branch
      %71 = sbr.rel (0) target = $region33
    $region32: #{tpu_custom_call.1} parent=1 // pred_region
      %s73 = ssub.s32 2048, 2048
      %74 = vsyncadd [#allocation9], %s73
      %s75 = sshll.u32 [#allocation10], 4
      %s76 = int_to_ptr.vmem [resolvable:$true] %s75
      %81 = dma.hbm_to_vmem [thread:$0]  %s7, 2048, %s76, [#allocation9], 128, 128, 8
    $region33: #{tpu_custom_call.1} parent=1 // pred_fallthru
      _
    // Predicated region
    $region34: #{tpu_custom_call.1} parent=1 // pred_check
      _
    $region35: #{tpu_custom_call.1} parent=1 // pred_check_branch
      %83 = sbr.rel (0) target = $region37
    $region36: #{tpu_custom_call.1} parent=1 // pred_region
      _
    $region37: #{tpu_custom_call.1} parent=1 // pred_fallthru
      _
    // Predicated region
    $region38: #{tpu_custom_call.1} parent=1 // pred_check
      _
    $region39: #{tpu_custom_call.1} parent=1 // pred_check_branch
      %85 = sbr.rel (0) target = $region41
    $region40: #{tpu_custom_call.1} parent=1 // pred_region
      %86 = dma.done [#allocation3], 128
    $region41: #{tpu_custom_call.1} parent=1 // pred_fallthru
      _
    // Predicated region
    $region42: #{tpu_custom_call.1} parent=1 // pred_check
      _
    $region43: #{tpu_custom_call.1} parent=1 // pred_check_branch
      %88 = sbr.rel (0) target = $region45
    $region44: #{tpu_custom_call.1} parent=1 // pred_region
      %89 = dma.done [#allocation6], 2048
    $region45: #{tpu_custom_call.1} parent=1 // pred_fallthru
      _
    // Predicated region
    $region46: #{tpu_custom_call.1} parent=1 // pred_check
      _
    $region47: #{tpu_custom_call.1} parent=1 // pred_check_branch
      %91 = sbr.rel (0) target = $region49
    $region48: #{tpu_custom_call.1} parent=1 // pred_region
      %92 = dma.done [#allocation6], 2048
    $region49: #{tpu_custom_call.1} parent=1 // pred_fallthru
      _
    // Predicated region
    $region50: #{tpu_custom_call.1} parent=1 // pred_check
      _
    $region51: #{tpu_custom_call.1} parent=1 // pred_check_branch
      %94 = sbr.rel (0) target = $region53
    $region52: #{tpu_custom_call.1} parent=1 // pred_region
      %95 = dma.done [#allocation9], 2048
    $region53: #{tpu_custom_call.1} parent=1 // pred_fallthru
      _
    // Predicated region
    $region54: #{tpu_custom_call.1} parent=1 // pred_check
      _
    $region55: #{tpu_custom_call.1} parent=1 // pred_check_branch
      %97 = sbr.rel (0) target = $region57
    $region56: #{tpu_custom_call.1} parent=1 // pred_region
      %98 = dma.done [#allocation9], 2048
    $region57: #{tpu_custom_call.1} parent=1 // pred_fallthru
      _
    %v99 = vld [vmem:[#allocation2] sm:$0xff]
    %v100 = vld [vmem:[#allocation5] sm:$0xff]
    %v101 = vld [vmem:[#allocation5 + $0x8] sm:$0xff]
    %v102 = vld [vmem:[#allocation5 + $0x10] sm:$0xff]
    %v103 = vld [vmem:[#allocation5 + $0x18] sm:$0xff]
    %v104 = vld [vmem:[#allocation5 + $0x20] sm:$0xff]
    %v105 = vld [vmem:[#allocation5 + $0x28] sm:$0xff]
    %v106 = vld [vmem:[#allocation5 + $0x30] sm:$0xff]
    %v107 = vld [vmem:[#allocation5 + $0x38] sm:$0xff]
    %v108 = vld [vmem:[#allocation5 + $0x40] sm:$0xff]
    %v109 = vld [vmem:[#allocation5 + $0x48] sm:$0xff]
    %v110 = vld [vmem:[#allocation5 + $0x50] sm:$0xff]
    %v111 = vld [vmem:[#allocation5 + $0x58] sm:$0xff]
    %v112 = vld [vmem:[#allocation5 + $0x60] sm:$0xff]
    %v113 = vld [vmem:[#allocation5 + $0x68] sm:$0xff]
    %v114 = vld [vmem:[#allocation5 + $0x70] sm:$0xff]
    %v115 = vld [vmem:[#allocation5 + $0x78] sm:$0xff]
    %v116 = vld [vmem:[%s2] sm:$0x1]
    %v118 = vlaneseq
    %v119 = vshrl.u32 %v118, 7
    %v120 = vsub.s32 0, %v119
    %v121 = vrot.slane %v116, %v120
    %123 = vmatprep.subr.mxu0 0.0
    %124 = vmatpush1.msra.mxu0 %v100
    %125 = vmatprep.subr.mxu0 0.0
    %126 = vmatpush1.msra.mxu0 %v101
    %127 = vmatprep.subr.mxu0 0.0
    %128 = vmatpush1.msra.mxu0 %v102
    %129 = vmatprep.subr.mxu0 0.0
    %130 = vmatpush1.msra.mxu0 %v103
    %131 = vmatprep.subr.mxu0 0.0
    %132 = vmatpush1.msra.mxu0 %v104
    %133 = vmatprep.subr.mxu0 0.0
    %134 = vmatpush1.msra.mxu0 %v105
    %135 = vmatprep.subr.mxu0 0.0
    %136 = vmatpush1.msra.mxu0 %v106
    %137 = vmatprep.subr.mxu0 0.0
    %138 = vmatpush1.msra.mxu0 %v107
    %139 = vmatprep.subr.mxu0 0.0
    %140 = vmatpush1.msra.mxu0 %v108
    %141 = vmatprep.subr.mxu0 0.0
    %142 = vmatpush1.msra.mxu0 %v109
    %143 = vmatprep.subr.mxu0 0.0
    %144 = vmatpush1.msra.mxu0 %v110
    %145 = vmatprep.subr.mxu0 0.0
    %146 = vmatpush1.msra.mxu0 %v111
    %147 = vmatprep.subr.mxu0 0.0
    %148 = vmatpush1.msra.mxu0 %v112
    %149 = vmatprep.subr.mxu0 0.0
    %150 = vmatpush1.msra.mxu0 %v113
    %151 = vmatprep.subr.mxu0 0.0
    %152 = vmatpush1.msra.mxu0 %v114
    %153 = vmatprep.subr.mxu0 0.0
    %154 = vmatpush1.msra.mxu0 %v115
    %155 = vmatprep.subr.mxu0 0.0
    %156 = vmatpush1.msra.mxu0 0.0
    %157 = vmatprep.subr.mxu0 0.0
    %158 = vmatpush1.msra.mxu0 0.0
    %159 = vmatprep.subr.mxu0 0.0
    %160 = vmatpush1.msra.mxu0 0.0
    %161 = vmatprep.subr.mxu0 0.0
    %162 = vmatpush1.msra.mxu0 0.0
    %163 = vmatprep.subr.mxu0 0.0
    %164 = vmatpush1.msra.mxu0 0.0
    %165 = vmatprep.subr.mxu0 0.0
    %166 = vmatpush1.msra.mxu0 0.0
    %167 = vmatprep.subr.mxu0 0.0
    %168 = vmatpush1.msra.mxu0 0.0
    %169 = vmatprep.subr.mxu0 0.0
    %170 = vmatpush1.msra.mxu0 0.0
    %171 = vmatprep.subr.mxu0 0.0
    %172 = vmatpush1.msra.mxu0 0.0
    %173 = vmatprep.subr.mxu0 0.0
    %174 = vmatpush1.msra.mxu0 0.0
    %175 = vmatprep.subr.mxu0 0.0
    %176 = vmatpush1.msra.mxu0 0.0
    %177 = vmatprep.subr.mxu0 0.0
    %178 = vmatpush1.msra.mxu0 0.0
    %179 = vmatprep.subr.mxu0 0.0
    %180 = vmatpush1.msra.mxu0 0.0
    %181 = vmatprep.subr.mxu0 0.0
    %182 = vmatpush1.msra.mxu0 0.0
    %183 = vmatprep.subr.mxu0 0.0
    %184 = vmatpush1.msra.mxu0 0.0
    %185 = vmatprep.subr.mxu0 0.0
    %186 = vmatpush1.msra.mxu0 0.0
    %187 = vmatprep.mubr.f32.mxu0 0.0
    %188 = vmatmul.mubr.f32.gmra.mrb[0].mxu0 %v99
    %v189 = vpop.f32.mrb[0].mxu0
    %v190 = vadd.f32 %v121, %v189
    %v191 = vpop.f32.mrb[0].mxu0
    %192 = vdwg.mxu0
    %vm193 = vcmp.ge.f32.partialorder %v190, 0.0
    %v194 = vmul.f32 %v190, 0.2
    %v195 = vsel %vm193, %v190, %v194
    %v196 = vld [vmem:[#allocation7] sm:$0xff]
    %v197 = vld [vmem:[#allocation7 + $0x8] sm:$0xff]
    %v198 = vld [vmem:[#allocation7 + $0x10] sm:$0xff]
    %v199 = vld [vmem:[#allocation7 + $0x18] sm:$0xff]
    %v200 = vld [vmem:[#allocation7 + $0x20] sm:$0xff]
    %v201 = vld [vmem:[#allocation7 + $0x28] sm:$0xff]
    %v202 = vld [vmem:[#allocation7 + $0x30] sm:$0xff]
    %v203 = vld [vmem:[#allocation7 + $0x38] sm:$0xff]
    %v204 = vld [vmem:[#allocation7 + $0x40] sm:$0xff]
    %v205 = vld [vmem:[#allocation7 + $0x48] sm:$0xff]
    %v206 = vld [vmem:[#allocation7 + $0x50] sm:$0xff]
    %v207 = vld [vmem:[#allocation7 + $0x58] sm:$0xff]
    %v208 = vld [vmem:[#allocation7 + $0x60] sm:$0xff]
    %v209 = vld [vmem:[#allocation7 + $0x68] sm:$0xff]
    %v210 = vld [vmem:[#allocation7 + $0x70] sm:$0xff]
    %v211 = vld [vmem:[#allocation7 + $0x78] sm:$0xff]
    %v212 = vld [vmem:[%s4] sm:$0x1]
    %v214 = vlaneseq
    %v215 = vshrl.u32 %v214, 7
    %v216 = vsub.s32 0, %v215
    %v217 = vrot.slane %v212, %v216
    %219 = vmatprep.subr.mxu0 0.0
    %220 = vmatpush1.msra.mxu0 %v196
    %221 = vmatprep.subr.mxu0 0.0
    %222 = vmatpush1.msra.mxu0 %v197
    %223 = vmatprep.subr.mxu0 0.0
    %224 = vmatpush1.msra.mxu0 %v198
    %225 = vmatprep.subr.mxu0 0.0
    %226 = vmatpush1.msra.mxu0 %v199
    %227 = vmatprep.subr.mxu0 0.0
    %228 = vmatpush1.msra.mxu0 %v200
    %229 = vmatprep.subr.mxu0 0.0
    %230 = vmatpush1.msra.mxu0 %v201
    %231 = vmatprep.subr.mxu0 0.0
    %232 = vmatpush1.msra.mxu0 %v202
    %233 = vmatprep.subr.mxu0 0.0
    %234 = vmatpush1.msra.mxu0 %v203
    %235 = vmatprep.subr.mxu0 0.0
    %236 = vmatpush1.msra.mxu0 %v204
    %237 = vmatprep.subr.mxu0 0.0
    %238 = vmatpush1.msra.mxu0 %v205
    %239 = vmatprep.subr.mxu0 0.0
    %240 = vmatpush1.msra.mxu0 %v206
    %241 = vmatprep.subr.mxu0 0.0
    %242 = vmatpush1.msra.mxu0 %v207
    %243 = vmatprep.subr.mxu0 0.0
    %244 = vmatpush1.msra.mxu0 %v208
    %245 = vmatprep.subr.mxu0 0.0
    %246 = vmatpush1.msra.mxu0 %v209
    %247 = vmatprep.subr.mxu0 0.0
    %248 = vmatpush1.msra.mxu0 %v210
    %249 = vmatprep.subr.mxu0 0.0
    %250 = vmatpush1.msra.mxu0 %v211
    %251 = vmatprep.subr.mxu0 0.0
    %252 = vmatpush1.msra.mxu0 0.0
    %253 = vmatprep.subr.mxu0 0.0
    %254 = vmatpush1.msra.mxu0 0.0
    %255 = vmatprep.subr.mxu0 0.0
    %256 = vmatpush1.msra.mxu0 0.0
    %257 = vmatprep.subr.mxu0 0.0
    %258 = vmatpush1.msra.mxu0 0.0
    %259 = vmatprep.subr.mxu0 0.0
    %260 = vmatpush1.msra.mxu0 0.0
    %261 = vmatprep.subr.mxu0 0.0
    %262 = vmatpush1.msra.mxu0 0.0
    %263 = vmatprep.subr.mxu0 0.0
    %264 = vmatpush1.msra.mxu0 0.0
    %265 = vmatprep.subr.mxu0 0.0
    %266 = vmatpush1.msra.mxu0 0.0
    %267 = vmatprep.subr.mxu0 0.0
    %268 = vmatpush1.msra.mxu0 0.0
    %269 = vmatprep.subr.mxu0 0.0
    %270 = vmatpush1.msra.mxu0 0.0
    %271 = vmatprep.subr.mxu0 0.0
    %272 = vmatpush1.msra.mxu0 0.0
    %273 = vmatprep.subr.mxu0 0.0
    %274 = vmatpush1.msra.mxu0 0.0
    %275 = vmatprep.subr.mxu0 0.0
    %276 = vmatpush1.msra.mxu0 0.0
    %277 = vmatprep.subr.mxu0 0.0
    %278 = vmatpush1.msra.mxu0 0.0
    %279 = vmatprep.subr.mxu0 0.0
    %280 = vmatpush1.msra.mxu0 0.0
    %281 = vmatprep.subr.mxu0 0.0
    %282 = vmatpush1.msra.mxu0 0.0
    %283 = vmatprep.mubr.f32.mxu0 0.0
    %284 = vmatmul.mubr.f32.gmra.mrb[0].mxu0 %v195
    %v285 = vpop.f32.mrb[0].mxu0
    %v286 = vadd.f32 %v217, %v285
    %v287 = vpop.f32.mrb[0].mxu0
    %288 = vdwg.mxu0
    %vm289 = vcmp.ge.f32.partialorder %v286, 0.0
    %v290 = vmul.f32 %v286, 0.2
    %v291 = vsel %vm289, %v286, %v290
    %v292 = vld [vmem:[#allocation8] sm:$0xff]
    %v293 = vld [vmem:[#allocation8 + $0x8] sm:$0xff]
    %v294 = vld [vmem:[#allocation8 + $0x10] sm:$0xff]
    %v295 = vld [vmem:[#allocation8 + $0x18] sm:$0xff]
    %v296 = vld [vmem:[#allocation8 + $0x20] sm:$0xff]
    %v297 = vld [vmem:[#allocation8 + $0x28] sm:$0xff]
    %v298 = vld [vmem:[#allocation8 + $0x30] sm:$0xff]
    %v299 = vld [vmem:[#allocation8 + $0x38] sm:$0xff]
    %v300 = vld [vmem:[#allocation8 + $0x40] sm:$0xff]
    %v301 = vld [vmem:[#allocation8 + $0x48] sm:$0xff]
    %v302 = vld [vmem:[#allocation8 + $0x50] sm:$0xff]
    %v303 = vld [vmem:[#allocation8 + $0x58] sm:$0xff]
    %v304 = vld [vmem:[#allocation8 + $0x60] sm:$0xff]
    %v305 = vld [vmem:[#allocation8 + $0x68] sm:$0xff]
    %v306 = vld [vmem:[#allocation8 + $0x70] sm:$0xff]
    %v307 = vld [vmem:[#allocation8 + $0x78] sm:$0xff]
    %v308 = vld [vmem:[%s6] sm:$0x1]
    %v310 = vlaneseq
    %v311 = vshrl.u32 %v310, 7
    %v312 = vsub.s32 0, %v311
    %v313 = vrot.slane %v308, %v312
    %315 = vmatprep.subr.mxu0 0.0
    %316 = vmatpush1.msra.mxu0 %v292
    %317 = vmatprep.subr.mxu0 0.0
    %318 = vmatpush1.msra.mxu0 %v293
    %319 = vmatprep.subr.mxu0 0.0
    %320 = vmatpush1.msra.mxu0 %v294
    %321 = vmatprep.subr.mxu0 0.0
    %322 = vmatpush1.msra.mxu0 %v295
    %323 = vmatprep.subr.mxu0 0.0
    %324 = vmatpush1.msra.mxu0 %v296
    %325 = vmatprep.subr.mxu0 0.0
    %326 = vmatpush1.msra.mxu0 %v297
    %327 = vmatprep.subr.mxu0 0.0
    %328 = vmatpush1.msra.mxu0 %v298
    %329 = vmatprep.subr.mxu0 0.0
    %330 = vmatpush1.msra.mxu0 %v299
    %331 = vmatprep.subr.mxu0 0.0
    %332 = vmatpush1.msra.mxu0 %v300
    %333 = vmatprep.subr.mxu0 0.0
    %334 = vmatpush1.msra.mxu0 %v301
    %335 = vmatprep.subr.mxu0 0.0
    %336 = vmatpush1.msra.mxu0 %v302
    %337 = vmatprep.subr.mxu0 0.0
    %338 = vmatpush1.msra.mxu0 %v303
    %339 = vmatprep.subr.mxu0 0.0
    %340 = vmatpush1.msra.mxu0 %v304
    %341 = vmatprep.subr.mxu0 0.0
    %342 = vmatpush1.msra.mxu0 %v305
    %343 = vmatprep.subr.mxu0 0.0
    %344 = vmatpush1.msra.mxu0 %v306
    %345 = vmatprep.subr.mxu0 0.0
    %346 = vmatpush1.msra.mxu0 %v307
    %347 = vmatprep.subr.mxu0 0.0
    %348 = vmatpush1.msra.mxu0 0.0
    %349 = vmatprep.subr.mxu0 0.0
    %350 = vmatpush1.msra.mxu0 0.0
    %351 = vmatprep.subr.mxu0 0.0
    %352 = vmatpush1.msra.mxu0 0.0
    %353 = vmatprep.subr.mxu0 0.0
    %354 = vmatpush1.msra.mxu0 0.0
    %355 = vmatprep.subr.mxu0 0.0
    %356 = vmatpush1.msra.mxu0 0.0
    %357 = vmatprep.subr.mxu0 0.0
    %358 = vmatpush1.msra.mxu0 0.0
    %359 = vmatprep.subr.mxu0 0.0
    %360 = vmatpush1.msra.mxu0 0.0
    %361 = vmatprep.subr.mxu0 0.0
    %362 = vmatpush1.msra.mxu0 0.0
    %363 = vmatprep.subr.mxu0 0.0
    %364 = vmatpush1.msra.mxu0 0.0
    %365 = vmatprep.subr.mxu0 0.0
    %366 = vmatpush1.msra.mxu0 0.0
    %367 = vmatprep.subr.mxu0 0.0
    %368 = vmatpush1.msra.mxu0 0.0
    %369 = vmatprep.subr.mxu0 0.0
    %370 = vmatpush1.msra.mxu0 0.0
    %371 = vmatprep.subr.mxu0 0.0
    %372 = vmatpush1.msra.mxu0 0.0
    %373 = vmatprep.subr.mxu0 0.0
    %374 = vmatpush1.msra.mxu0 0.0
    %375 = vmatprep.subr.mxu0 0.0
    %376 = vmatpush1.msra.mxu0 0.0
    %377 = vmatprep.subr.mxu0 0.0
    %378 = vmatpush1.msra.mxu0 0.0
    %379 = vmatprep.mubr.f32.mxu0 0.0
    %380 = vmatmul.mubr.f32.gmra.mrb[0].mxu0 %v291
    %v381 = vpop.f32.mrb[0].mxu0
    %v382 = vadd.f32 %v313, %v381
    %v383 = vpop.f32.mrb[0].mxu0
    %384 = vdwg.mxu0
    %vm385 = vcmp.ge.f32.partialorder %v382, 0.0
    %v386 = vmul.f32 %v382, 0.2
    %v387 = vsel %vm385, %v382, %v386
    %v388 = vld [vmem:[#allocation10] sm:$0xff]
    %v389 = vld [vmem:[#allocation10 + $0x8] sm:$0xff]
    %v390 = vld [vmem:[#allocation10 + $0x10] sm:$0xff]
    %v391 = vld [vmem:[#allocation10 + $0x18] sm:$0xff]
    %v392 = vld [vmem:[#allocation10 + $0x20] sm:$0xff]
    %v393 = vld [vmem:[#allocation10 + $0x28] sm:$0xff]
    %v394 = vld [vmem:[#allocation10 + $0x30] sm:$0xff]
    %v395 = vld [vmem:[#allocation10 + $0x38] sm:$0xff]
    %v396 = vld [vmem:[#allocation10 + $0x40] sm:$0xff]
    %v397 = vld [vmem:[#allocation10 + $0x48] sm:$0xff]
    %v398 = vld [vmem:[#allocation10 + $0x50] sm:$0xff]
    %v399 = vld [vmem:[#allocation10 + $0x58] sm:$0xff]
    %v400 = vld [vmem:[#allocation10 + $0x60] sm:$0xff]
    %v401 = vld [vmem:[#allocation10 + $0x68] sm:$0xff]
    %v402 = vld [vmem:[#allocation10 + $0x70] sm:$0xff]
    %v403 = vld [vmem:[#allocation10 + $0x78] sm:$0xff]
    %v404 = vld [vmem:[%s8] sm:$0x1]
    %v406 = vlaneseq
    %v407 = vshrl.u32 %v406, 7
    %v408 = vsub.s32 0, %v407
    %v409 = vrot.slane %v404, %v408
    %411 = vmatprep.subr.mxu0 0.0
    %412 = vmatpush1.msra.mxu0 %v388
    %413 = vmatprep.subr.mxu0 0.0
    %414 = vmatpush1.msra.mxu0 %v389
    %415 = vmatprep.subr.mxu0 0.0
    %416 = vmatpush1.msra.mxu0 %v390
    %417 = vmatprep.subr.mxu0 0.0
    %418 = vmatpush1.msra.mxu0 %v391
    %419 = vmatprep.subr.mxu0 0.0
    %420 = vmatpush1.msra.mxu0 %v392
    %421 = vmatprep.subr.mxu0 0.0
    %422 = vmatpush1.msra.mxu0 %v393
    %423 = vmatprep.subr.mxu0 0.0
    %424 = vmatpush1.msra.mxu0 %v394
    %425 = vmatprep.subr.mxu0 0.0
    %426 = vmatpush1.msra.mxu0 %v395
    %427 = vmatprep.subr.mxu0 0.0
    %428 = vmatpush1.msra.mxu0 %v396
    %429 = vmatprep.subr.mxu0 0.0
    %430 = vmatpush1.msra.mxu0 %v397
    %431 = vmatprep.subr.mxu0 0.0
    %432 = vmatpush1.msra.mxu0 %v398
    %433 = vmatprep.subr.mxu0 0.0
    %434 = vmatpush1.msra.mxu0 %v399
    %435 = vmatprep.subr.mxu0 0.0
    %436 = vmatpush1.msra.mxu0 %v400
    %437 = vmatprep.subr.mxu0 0.0
    %438 = vmatpush1.msra.mxu0 %v401
    %439 = vmatprep.subr.mxu0 0.0
    %440 = vmatpush1.msra.mxu0 %v402
    %441 = vmatprep.subr.mxu0 0.0
    %442 = vmatpush1.msra.mxu0 %v403
    %443 = vmatprep.subr.mxu0 0.0
    %444 = vmatpush1.msra.mxu0 0.0
    %445 = vmatprep.subr.mxu0 0.0
    %446 = vmatpush1.msra.mxu0 0.0
    %447 = vmatprep.subr.mxu0 0.0
    %448 = vmatpush1.msra.mxu0 0.0
    %449 = vmatprep.subr.mxu0 0.0
    %450 = vmatpush1.msra.mxu0 0.0
    %451 = vmatprep.subr.mxu0 0.0
    %452 = vmatpush1.msra.mxu0 0.0
    %453 = vmatprep.subr.mxu0 0.0
    %454 = vmatpush1.msra.mxu0 0.0
    %455 = vmatprep.subr.mxu0 0.0
    %456 = vmatpush1.msra.mxu0 0.0
    %457 = vmatprep.subr.mxu0 0.0
    %458 = vmatpush1.msra.mxu0 0.0
    %459 = vmatprep.subr.mxu0 0.0
    %460 = vmatpush1.msra.mxu0 0.0
    %461 = vmatprep.subr.mxu0 0.0
    %462 = vmatpush1.msra.mxu0 0.0
    %463 = vmatprep.subr.mxu0 0.0
    %464 = vmatpush1.msra.mxu0 0.0
    %465 = vmatprep.subr.mxu0 0.0
    %466 = vmatpush1.msra.mxu0 0.0
    %467 = vmatprep.subr.mxu0 0.0
    %468 = vmatpush1.msra.mxu0 0.0
    %469 = vmatprep.subr.mxu0 0.0
    %470 = vmatpush1.msra.mxu0 0.0
    %471 = vmatprep.subr.mxu0 0.0
    %472 = vmatpush1.msra.mxu0 0.0
    %473 = vmatprep.subr.mxu0 0.0
    %474 = vmatpush1.msra.mxu0 0.0
    %475 = vmatprep.mubr.f32.mxu0 0.0
    %476 = vmatmul.mubr.f32.gmra.mrb[0].mxu0 %v387
    %v477 = vpop.f32.mrb[0].mxu0
    %v478 = vadd.f32 %v409, %v477
    %v479 = vpop.f32.mrb[0].mxu0
    %480 = vdwg.mxu0
    %v481 = vtanh.pop %v478
    %482 = vst [vmem:[#allocation11] sm:$0xff] %v481
    // Predicated region
    $region58: #{tpu_custom_call.1} parent=1 // pred_check
      _
    $region59: #{tpu_custom_call.1} parent=1 // pred_check_branch
      %484 = sbr.rel (0) target = $region61
    $region60: #{tpu_custom_call.1} parent=1 // pred_region
      %s486 = ssub.s32 128, 128
      %487 = vsyncadd [#allocation4], %s486
      %s489 = sshll.u32 [#allocation11], 4
      %s490 = int_to_ptr.vmem [resolvable:$true] %s489
      %492 = dma.vmem_to_hbm [thread:$0]  %s490, 128, %s9, [#allocation4]
    $region61: #{tpu_custom_call.1} parent=1 // pred_fallthru
      _
    // Predicated region
    $region62: #{tpu_custom_call.1} parent=1 // pred_check
      _
    $region63: #{tpu_custom_call.1} parent=1 // pred_check_branch
      %494 = sbr.rel (0) target = $region65
    $region64: #{tpu_custom_call.1} parent=1 // pred_region
      %495 = dma.done [#allocation4], 128
    $region65: #{tpu_custom_call.1} parent=1 // pred_fallthru
      _
    %496 = vsyncpa [#allocation3], 1
    %497 = vsyncpa [#allocation6], 1
    %498 = vsyncpa [#allocation9], 1
    %499 = vsyncpa [#allocation4], 1

</llo_original>
